<compile_context>
chip_gen: v7x
topology: tpu7x:2x2x1
jax: 0.10.0
libtpu: 0.0.40
codegen_flags: <defaults>
</compile_context>

<pallas_src>
import jax
import jax.numpy as jnp
from jax import lax
from jax.experimental import pallas as pl
from jax.experimental.pallas import tpu as pltpu

KS = 7           # conv kernel size
PAD = KS // 2    # 3


def _round_up(n, m):
    return (n + m - 1) // m * m


def _pick_c_tile(C, L, budget_bytes=4 * 1024 * 1024):
    """Largest channel tile whose f32 block fits `budget_bytes`.

    Returns C when the whole channel dim fits; otherwise the largest divisor
    of C that is a multiple of 8 (keeps the block's second-to-last dim legal).
    """
    if C * L * 4 <= budget_bytes:
        return C
    best = None
    t = 8
    while t < C:
        if C % t == 0 and t * L * 4 <= budget_bytes:
            best = t
        t += 8
    return best if best is not None else C


def spatial_attention(x, weight):
    """x: (B, C, H, W) f32, weight: (1, 2, KS, KS) f32 -> (B, 1, H, W) f32."""
    B, C, H, W = x.shape
    L = H * W

    # Lane-dense flat view of the spatial dims.
    x_flat = x.astype(jnp.float32).reshape(B, C, L)

    # Flatten weights; fold the channel-mean's 1/C into the 49 "avg" taps.
    w_flat = weight.astype(jnp.float32).reshape(-1)           # (2*KS*KS,)
    w_flat = w_flat.at[: KS * KS].multiply(1.0 / C)

    C_TILE = _pick_c_tile(C, L)
    NC = C // C_TILE

    # Padded flat-scratch geometry for the 7x7 conv on the flattened maps.
    HALO = PAD * W + PAD                    # max |dh*W + dw|
    OFF0 = _round_up(HALO, 128)             # 128-aligned interior start
    LP = _round_up(OFF0 + L + HALO, 128)    # padded scratch length

    # Per-dw column-validity masks (horizontal conv boundary), precomputed.
    col = jnp.arange(L, dtype=jnp.int32) % W
    masks = jnp.stack(
        [((col + (kw - PAD) >= 0) & (col + (kw - PAD) < W)).astype(jnp.float32)
         for kw in range(KS)],
        axis=0)                                               # (KS, L)

    def kernel(w_ref, mask_ref, x_ref, o_ref, sum_acc, max_acc, pad_a, pad_m):
        k = pl.program_id(1)
        nk = pl.num_programs(1)

        x_blk = x_ref[0]                                      # (C_TILE, L)
        part_sum = jnp.sum(x_blk, axis=0, keepdims=True)      # (1, L)
        part_max = jnp.max(x_blk, axis=0, keepdims=True)      # (1, L)

        @pl.when(k == 0)
        def _init():
            sum_acc[...] = part_sum
            max_acc[...] = part_max

        @pl.when(k > 0)
        def _accum():
            sum_acc[...] = sum_acc[...] + part_sum
            max_acc[...] = jnp.maximum(max_acc[...], part_max)

        @pl.when(k == nk - 1)
        def _finalize():
            # Write the two reduced maps once into zero-padded flat scratch.
            pad_a[...] = jnp.zeros_like(pad_a)
            pad_m[...] = jnp.zeros_like(pad_m)
            pad_a[:, pl.ds(OFF0, L)] = sum_acc[...]
            pad_m[:, pl.ds(OFF0, L)] = max_acc[...]

            def tap(scr, kh, kw):
                off = OFF0 + (kh - PAD) * W + (kw - PAD)      # static offset
                return scr[:, pl.ds(off, L)]                  # (1, L)

            partials = []
            for kw in range(KS):
                # Two independent accumulator chains per column offset.
                pa = w_ref[kw] * tap(pad_a, 0, kw)
                pm = w_ref[KS * KS + kw] * tap(pad_m, 0, kw)
                for kh in range(1, KS):
                    pa = pa + w_ref[kh * KS + kw] * tap(pad_a, kh, kw)
                    pm = pm + w_ref[KS * KS + kh * KS + kw] * tap(pad_m, kh, kw)
                p = pa + pm
                if kw != PAD:                                 # horizontal edge
                    p = p * mask_ref[pl.ds(kw, 1), :]
                partials.append(p)

            # Tree-sum the 7 independent partials.
            while len(partials) > 1:
                nxt = [partials[i] + partials[i + 1]
                       for i in range(0, len(partials) - 1, 2)]
                if len(partials) % 2:
                    nxt.append(partials[-1])
                partials = nxt

            o_ref[0] = jax.nn.sigmoid(partials[0])            # lane-dense store

    out_flat = pl.pallas_call(
        kernel,
        out_shape=jax.ShapeDtypeStruct((B, 1, L), jnp.float32),
        grid_spec=pltpu.PrefetchScalarGridSpec(
            num_scalar_prefetch=0,
            grid=(B, NC),
            in_specs=[
                pl.BlockSpec(memory_space=pltpu.MemorySpace.SMEM),      # weights
                pl.BlockSpec((KS, L), lambda b, k: (0, 0)),             # masks
                pl.BlockSpec((1, C_TILE, L), lambda b, k: (b, k, 0)),   # x tile
            ],
            out_specs=pl.BlockSpec((1, 1, L), lambda b, k: (b, 0, 0)),
            scratch_shapes=[
                pltpu.VMEM((1, L), jnp.float32),    # running channel sum
                pltpu.VMEM((1, L), jnp.float32),    # running channel max
                pltpu.VMEM((1, LP), jnp.float32),   # padded flat avg map
                pltpu.VMEM((1, LP), jnp.float32),   # padded flat max map
            ],
        ),
        compiler_params=pltpu.CompilerParams(
            dimension_semantics=("parallel", "arbitrary"),
        ),
        cost_estimate=pl.CostEstimate(
            flops=B * (2 * C * L + 4 * KS * KS * L),
            transcendentals=B * L,
            bytes_accessed=4 * (B * C * L + B * L + KS * L + 2 * KS * KS),
        ),
    )(w_flat, masks, x_flat)

    return out_flat.reshape(B, 1, H, W)


def spatial_attention_ref(x, weight):
    """Pure-JAX reference mirroring the PyTorch forward."""
    avg = jnp.mean(x, axis=1, keepdims=True)
    mx = jnp.max(x, axis=1, keepdims=True)
    cat = jnp.concatenate([avg, mx], axis=1)                  # (B, 2, H, W)
    y = lax.conv_general_dilated(
        cat, weight,
        window_strides=(1, 1),
        padding=((PAD, PAD), (PAD, PAD)),
        dimension_numbers=("NCHW", "OIHW", "NCHW"),
        precision=lax.Precision.HIGHEST,
    )
    return jax.nn.sigmoid(y)


if __name__ == "__main__":
    key = jax.random.PRNGKey(0)
    kx, kw_key = jax.random.split(key)

    B, C, H, W = 2, 4, 16, 16
    x = jax.random.normal(kx, (B, C, H, W), dtype=jnp.float32)

    # Same init range as nn.Conv2d(2, 1, 7, bias=False): weight (1, 2, 7, 7).
    bound = 1.0 / (2 * KS * KS) ** 0.5
    weight = jax.random.uniform(
        kw_key, (1, 2, KS, KS), dtype=jnp.float32, minval=-bound, maxval=bound)

    out = jax.block_until_ready(spatial_attention(x, weight))

    ref = spatial_attention_ref(x, weight)
    assert out.shape == (B, 1, H, W)
    err = float(jnp.max(jnp.abs(out - ref)))
    assert err < 1e-5, f"max abs err = {err}"

    print("KERNEL_OK")
</pallas_src>

<mosaic_0001>
module attributes {stable_mosaic.version = 11 : i64} {
  func.func @kernel(%arg0: i32, %arg1: i32, %arg2: memref<98xf32, #tpu.memory_space<smem>>, %arg3: memref<7x256xf32, #tpu.memory_space<vmem>>, %arg4: memref<1x4x256xf32, #tpu.memory_space<vmem>>, %arg5: memref<1x1x256xf32, #tpu.memory_space<vmem>>, %arg6: memref<1x256xf32, #tpu.memory_space<vmem>>, %arg7: memref<1x256xf32, #tpu.memory_space<vmem>>, %arg8: memref<1x512xf32, #tpu.memory_space<vmem>>, %arg9: memref<1x512xf32, #tpu.memory_space<vmem>>) attributes {dimension_semantics = [#tpu.dimension_semantics<parallel>, #tpu.dimension_semantics<arbitrary>], iteration_bounds = array<i64: 2, 1>, scalar_prefetch = 0 : i64, scratch_operands = 4 : i64, tpu.core_type = #tpu.core_type<tc>, window_params = [{transform_indices = @transform_0, window_bounds = array<i64: 98>}, {pipeline_mode = #tpu.pipeline_mode<synchronous>, transform_indices = @transform_1, window_bounds = array<i64: 7, 256>}, {transform_indices = @transform_2, window_bounds = array<i64: 1, 4, 256>}, {transform_indices = @transform_3, window_bounds = array<i64: 1, 1, 256>}]} {
    %c0 = arith.constant 0 : index
    %c0_0 = arith.constant 0 : index
    %c0_1 = arith.constant 0 : index
    %0 = vector.load %arg4[%c0, %c0_0, %c0_1] : memref<1x4x256xf32, #tpu.memory_space<vmem>>, vector<1x4x256xf32>
    %1 = vector.shape_cast %0 : vector<1x4x256xf32> to vector<4x256xf32>
    %cst = arith.constant dense<0.000000e+00> : vector<256xf32>
    %2 = vector.multi_reduction <add>, %1, %cst [0] : vector<4x256xf32> to vector<256xf32>
    %3 = vector.shape_cast %2 : vector<256xf32> to vector<1x256xf32>
    %cst_2 = arith.constant dense<0xFF800000> : vector<256xf32>
    %4 = vector.multi_reduction <maximumf>, %1, %cst_2 [0] : vector<4x256xf32> to vector<256xf32>
    %5 = vector.shape_cast %4 : vector<256xf32> to vector<1x256xf32>
    %c0_i32 = arith.constant 0 : i32
    %6 = arith.cmpi eq, %arg1, %c0_i32 : i32
    %7 = arith.extui %6 : i1 to i32
    %c0_i32_3 = arith.constant 0 : i32
    %8 = arith.cmpi ne, %7, %c0_i32_3 : i32
    scf.if %8 {
      %c0_8 = arith.constant 0 : index
      %c0_9 = arith.constant 0 : index
      %15 = vector.load %arg6[%c0_8, %c0_9] : memref<1x256xf32, #tpu.memory_space<vmem>>, vector<1x256xf32>
      tpu.vector_store %arg6[%c0_8, %c0_9], %3 {strides = array<i32>} : memref<1x256xf32, #tpu.memory_space<vmem>>, vector<1x256xf32>,
      %c0_10 = arith.constant 0 : index
      %c0_11 = arith.constant 0 : index
      %16 = vector.load %arg7[%c0_10, %c0_11] : memref<1x256xf32, #tpu.memory_space<vmem>>, vector<1x256xf32>
      tpu.vector_store %arg7[%c0_10, %c0_11], %5 {strides = array<i32>} : memref<1x256xf32, #tpu.memory_space<vmem>>, vector<1x256xf32>,
    } else {
    }
    %c0_i32_4 = arith.constant 0 : i32
    %9 = arith.cmpi sgt, %arg1, %c0_i32_4 : i32
    %10 = arith.extui %9 : i1 to i32
    %c0_i32_5 = arith.constant 0 : i32
    %11 = arith.cmpi ne, %10, %c0_i32_5 : i32
    scf.if %11 {
      %c0_8 = arith.constant 0 : index
      %c0_9 = arith.constant 0 : index
      %15 = vector.load %arg6[%c0_8, %c0_9] : memref<1x256xf32, #tpu.memory_space<vmem>>, vector<1x256xf32>
      %16 = arith.addf %15, %3 : vector<1x256xf32>
      %c0_10 = arith.constant 0 : index
      %c0_11 = arith.constant 0 : index
      %17 = vector.load %arg6[%c0_10, %c0_11] : memref<1x256xf32, #tpu.memory_space<vmem>>, vector<1x256xf32>
      tpu.vector_store %arg6[%c0_10, %c0_11], %16 {strides = array<i32>} : memref<1x256xf32, #tpu.memory_space<vmem>>, vector<1x256xf32>,
      %c0_12 = arith.constant 0 : index
      %c0_13 = arith.constant 0 : index
      %18 = vector.load %arg7[%c0_12, %c0_13] : memref<1x256xf32, #tpu.memory_space<vmem>>, vector<1x256xf32>
      %19 = arith.maximumf %18, %5 : vector<1x256xf32>
      %c0_14 = arith.constant 0 : index
      %c0_15 = arith.constant 0 : index
      %20 = vector.load %arg7[%c0_14, %c0_15] : memref<1x256xf32, #tpu.memory_space<vmem>>, vector<1x256xf32>
      tpu.vector_store %arg7[%c0_14, %c0_15], %19 {strides = array<i32>} : memref<1x256xf32, #tpu.memory_space<vmem>>, vector<1x256xf32>,
    } else {
    }
    %c0_i32_6 = arith.constant 0 : i32
    %12 = arith.cmpi eq, %arg1, %c0_i32_6 : i32
    %13 = arith.extui %12 : i1 to i32
    %c0_i32_7 = arith.constant 0 : i32
    %14 = arith.cmpi ne, %13, %c0_i32_7 : i32
    scf.if %14 {
      %cst_8 = arith.constant 0.000000e+00 : f32
      %15 = vector.broadcast %cst_8 : f32 to vector<1x512xf32>
      %c0_9 = arith.constant 0 : index
      %c0_10 = arith.constant 0 : index
      %16 = vector.load %arg8[%c0_9, %c0_10] : memref<1x512xf32, #tpu.memory_space<vmem>>, vector<1x512xf32>
      tpu.vector_store %arg8[%c0_9, %c0_10], %15 {strides = array<i32>} : memref<1x512xf32, #tpu.memory_space<vmem>>, vector<1x512xf32>,
      %cst_11 = arith.constant 0.000000e+00 : f32
      %17 = vector.broadcast %cst_11 : f32 to vector<1x512xf32>
      %c0_12 = arith.constant 0 : index
      %c0_13 = arith.constant 0 : index
      %18 = vector.load %arg9[%c0_12, %c0_13] : memref<1x512xf32, #tpu.memory_space<vmem>>, vector<1x512xf32>
      tpu.vector_store %arg9[%c0_12, %c0_13], %17 {strides = array<i32>} : memref<1x512xf32, #tpu.memory_space<vmem>>, vector<1x512xf32>,
      %c0_14 = arith.constant 0 : index
      %c0_15 = arith.constant 0 : index
      %19 = vector.load %arg6[%c0_14, %c0_15] : memref<1x256xf32, #tpu.memory_space<vmem>>, vector<1x256xf32>
      %c0_16 = arith.constant 0 : index
      %c128 = arith.constant 128 : index
      %20 = vector.load %arg8[%c0_16, %c128] : memref<1x512xf32, #tpu.memory_space<vmem>>, vector<1x256xf32>
      tpu.vector_store %arg8[%c0_16, %c128], %19 {strides = array<i32>} : memref<1x512xf32, #tpu.memory_space<vmem>>, vector<1x256xf32>,
      %c0_17 = arith.constant 0 : index
      %c0_18 = arith.constant 0 : index
      %21 = vector.load %arg7[%c0_17, %c0_18] : memref<1x256xf32, #tpu.memory_space<vmem>>, vector<1x256xf32>
      %c0_19 = arith.constant 0 : index
      %c128_20 = arith.constant 128 : index
      %22 = vector.load %arg9[%c0_19, %c128_20] : memref<1x512xf32, #tpu.memory_space<vmem>>, vector<1x256xf32>
      tpu.vector_store %arg9[%c0_19, %c128_20], %21 {strides = array<i32>} : memref<1x512xf32, #tpu.memory_space<vmem>>, vector<1x256xf32>,
      %c0_21 = arith.constant 0 : index
      %23 = memref.load %arg2[%c0_21] : memref<98xf32, #tpu.memory_space<smem>>
      %c0_22 = arith.constant 0 : index
      %c77 = arith.constant 77 : index
      %24 = vector.load %arg8[%c0_22, %c77] : memref<1x512xf32, #tpu.memory_space<vmem>>, vector<1x256xf32>
      %25 = vector.broadcast %23 : f32 to vector<1x256xf32>
      %26 = arith.mulf %25, %24 : vector<1x256xf32>
      %c49 = arith.constant 49 : index
      %27 = memref.load %arg2[%c49] : memref<98xf32, #tpu.memory_space<smem>>
      %c0_23 = arith.constant 0 : index
      %c77_24 = arith.constant 77 : index
      %28 = vector.load %arg9[%c0_23, %c77_24] : memref<1x512xf32, #tpu.memory_space<vmem>>, vector<1x256xf32>
      %29 = vector.broadcast %27 : f32 to vector<1x256xf32>
      %30 = arith.mulf %29, %28 : vector<1x256xf32>
      %c7 = arith.constant 7 : index
      %31 = memref.load %arg2[%c7] : memref<98xf32, #tpu.memory_space<smem>>
      %c0_25 = arith.constant 0 : index
      %c93 = arith.constant 93 : index
      %32 = vector.load %arg8[%c0_25, %c93] : memref<1x512xf32, #tpu.memory_space<vmem>>, vector<1x256xf32>
      %33 = vector.broadcast %31 : f32 to vector<1x256xf32>
      %34 = arith.mulf %33, %32 : vector<1x256xf32>
      %35 = arith.addf %26, %34 : vector<1x256xf32>
      %c56 = arith.constant 56 : index
      %36 = memref.load %arg2[%c56] : memref<98xf32, #tpu.memory_space<smem>>
      %c0_26 = arith.constant 0 : index
      %c93_27 = arith.constant 93 : index
      %37 = vector.load %arg9[%c0_26, %c93_27] : memref<1x512xf32, #tpu.memory_space<vmem>>, vector<1x256xf32>
      %38 = vector.broadcast %36 : f32 to vector<1x256xf32>
      %39 = arith.mulf %38, %37 : vector<1x256xf32>
      %40 = arith.addf %30, %39 : vector<1x256xf32>
      %c14 = arith.constant 14 : index
      %41 = memref.load %arg2[%c14] : memref<98xf32, #tpu.memory_space<smem>>
      %c0_28 = arith.constant 0 : index
      %c109 = arith.constant 109 : index
      %42 = vector.load %arg8[%c0_28, %c109] : memref<1x512xf32, #tpu.memory_space<vmem>>, vector<1x256xf32>
      %43 = vector.broadcast %41 : f32 to vector<1x256xf32>
      %44 = arith.mulf %43, %42 : vector<1x256xf32>
      %45 = arith.addf %35, %44 : vector<1x256xf32>
      %c63 = arith.constant 63 : index
      %46 = memref.load %arg2[%c63] : memref<98xf32, #tpu.memory_space<smem>>
      %c0_29 = arith.constant 0 : index
      %c109_30 = arith.constant 109 : index
      %47 = vector.load %arg9[%c0_29, %c109_30] : memref<1x512xf32, #tpu.memory_space<vmem>>, vector<1x256xf32>
      %48 = vector.broadcast %46 : f32 to vector<1x256xf32>
      %49 = arith.mulf %48, %47 : vector<1x256xf32>
      %50 = arith.addf %40, %49 : vector<1x256xf32>
      %c21 = arith.constant 21 : index
      %51 = memref.load %arg2[%c21] : memref<98xf32, #tpu.memory_space<smem>>
      %c0_31 = arith.constant 0 : index
      %c125 = arith.constant 125 : index
      %52 = vector.load %arg8[%c0_31, %c125] : memref<1x512xf32, #tpu.memory_space<vmem>>, vector<1x256xf32>
      %53 = vector.broadcast %51 : f32 to vector<1x256xf32>
      %54 = arith.mulf %53, %52 : vector<1x256xf32>
      %55 = arith.addf %45, %54 : vector<1x256xf32>
      %c70 = arith.constant 70 : index
      %56 = memref.load %arg2[%c70] : memref<98xf32, #tpu.memory_space<smem>>
      %c0_32 = arith.constant 0 : index
      %c125_33 = arith.constant 125 : index
      %57 = vector.load %arg9[%c0_32, %c125_33] : memref<1x512xf32, #tpu.memory_space<vmem>>, vector<1x256xf32>
      %58 = vector.broadcast %56 : f32 to vector<1x256xf32>
      %59 = arith.mulf %58, %57 : vector<1x256xf32>
      %60 = arith.addf %50, %59 : vector<1x256xf32>
      %c28 = arith.constant 28 : index
      %61 = memref.load %arg2[%c28] : memref<98xf32, #tpu.memory_space<smem>>
      %c0_34 = arith.constant 0 : index
      %c141 = arith.constant 141 : index
      %62 = vector.load %arg8[%c0_34, %c141] : memref<1x512xf32, #tpu.memory_space<vmem>>, vector<1x256xf32>
      %63 = vector.broadcast %61 : f32 to vector<1x256xf32>
      %64 = arith.mulf %63, %62 : vector<1x256xf32>
      %65 = arith.addf %55, %64 : vector<1x256xf32>
      %c77_35 = arith.constant 77 : index
      %66 = memref.load %arg2[%c77_35] : memref<98xf32, #tpu.memory_space<smem>>
      %c0_36 = arith.constant 0 : index
      %c141_37 = arith.constant 141 : index
      %67 = vector.load %arg9[%c0_36, %c141_37] : memref<1x512xf32, #tpu.memory_space<vmem>>, vector<1x256xf32>
      %68 = vector.broadcast %66 : f32 to vector<1x256xf32>
      %69 = arith.mulf %68, %67 : vector<1x256xf32>
      %70 = arith.addf %60, %69 : vector<1x256xf32>
      %c35 = arith.constant 35 : index
      %71 = memref.load %arg2[%c35] : memref<98xf32, #tpu.memory_space<smem>>
      %c0_38 = arith.constant 0 : index
      %c157 = arith.constant 157 : index
      %72 = vector.load %arg8[%c0_38, %c157] : memref<1x512xf32, #tpu.memory_space<vmem>>, vector<1x256xf32>
      %73 = vector.broadcast %71 : f32 to vector<1x256xf32>
      %74 = arith.mulf %73, %72 : vector<1x256xf32>
      %75 = arith.addf %65, %74 : vector<1x256xf32>
      %c84 = arith.constant 84 : index
      %76 = memref.load %arg2[%c84] : memref<98xf32, #tpu.memory_space<smem>>
      %c0_39 = arith.constant 0 : index
      %c157_40 = arith.constant 157 : index
      %77 = vector.load %arg9[%c0_39, %c157_40] : memref<1x512xf32, #tpu.memory_space<vmem>>, vector<1x256xf32>
      %78 = vector.broadcast %76 : f32 to vector<1x256xf32>
      %79 = arith.mulf %78, %77 : vector<1x256xf32>
      %80 = arith.addf %70, %79 : vector<1x256xf32>
      %c42 = arith.constant 42 : index
      %81 = memref.load %arg2[%c42] : memref<98xf32, #tpu.memory_space<smem>>
      %c0_41 = arith.constant 0 : index
      %c173 = arith.constant 173 : index
      %82 = vector.load %arg8[%c0_41, %c173] : memref<1x512xf32, #tpu.memory_space<vmem>>, vector<1x256xf32>
      %83 = vector.broadcast %81 : f32 to vector<1x256xf32>
      %84 = arith.mulf %83, %82 : vector<1x256xf32>
      %85 = arith.addf %75, %84 : vector<1x256xf32>
      %c91 = arith.constant 91 : index
      %86 = memref.load %arg2[%c91] : memref<98xf32, #tpu.memory_space<smem>>
      %c0_42 = arith.constant 0 : index
      %c173_43 = arith.constant 173 : index
      %87 = vector.load %arg9[%c0_42, %c173_43] : memref<1x512xf32, #tpu.memory_space<vmem>>, vector<1x256xf32>
      %88 = vector.broadcast %86 : f32 to vector<1x256xf32>
      %89 = arith.mulf %88, %87 : vector<1x256xf32>
      %90 = arith.addf %80, %89 : vector<1x256xf32>
      %91 = arith.addf %85, %90 : vector<1x256xf32>
      %c0_44 = arith.constant 0 : index
      %c0_45 = arith.constant 0 : index
      %92 = vector.load %arg3[%c0_44, %c0_45] : memref<7x256xf32, #tpu.memory_space<vmem>>, vector<1x256xf32>
      %93 = arith.mulf %91, %92 : vector<1x256xf32>
      %c1 = arith.constant 1 : index
      %94 = memref.load %arg2[%c1] : memref<98xf32, #tpu.memory_space<smem>>
      %c0_46 = arith.constant 0 : index
      %c78 = arith.constant 78 : index
      %95 = vector.load %arg8[%c0_46, %c78] : memref<1x512xf32, #tpu.memory_space<vmem>>, vector<1x256xf32>
      %96 = vector.broadcast %94 : f32 to vector<1x256xf32>
      %97 = arith.mulf %96, %95 : vector<1x256xf32>
      %c50 = arith.constant 50 : index
      %98 = memref.load %arg2[%c50] : memref<98xf32, #tpu.memory_space<smem>>
      %c0_47 = arith.constant 0 : index
      %c78_48 = arith.constant 78 : index
      %99 = vector.load %arg9[%c0_47, %c78_48] : memref<1x512xf32, #tpu.memory_space<vmem>>, vector<1x256xf32>
      %100 = vector.broadcast %98 : f32 to vector<1x256xf32>
      %101 = arith.mulf %100, %99 : vector<1x256xf32>
      %c8 = arith.constant 8 : index
      %102 = memref.load %arg2[%c8] : memref<98xf32, #tpu.memory_space<smem>>
      %c0_49 = arith.constant 0 : index
      %c94 = arith.constant 94 : index
      %103 = vector.load %arg8[%c0_49, %c94] : memref<1x512xf32, #tpu.memory_space<vmem>>, vector<1x256xf32>
      %104 = vector.broadcast %102 : f32 to vector<1x256xf32>
      %105 = arith.mulf %104, %103 : vector<1x256xf32>
      %106 = arith.addf %97, %105 : vector<1x256xf32>
      %c57 = arith.constant 57 : index
      %107 = memref.load %arg2[%c57] : memref<98xf32, #tpu.memory_space<smem>>
      %c0_50 = arith.constant 0 : index
      %c94_51 = arith.constant 94 : index
      %108 = vector.load %arg9[%c0_50, %c94_51] : memref<1x512xf32, #tpu.memory_space<vmem>>, vector<1x256xf32>
      %109 = vector.broadcast %107 : f32 to vector<1x256xf32>
      %110 = arith.mulf %109, %108 : vector<1x256xf32>
      %111 = arith.addf %101, %110 : vector<1x256xf32>
      %c15 = arith.constant 15 : index
      %112 = memref.load %arg2[%c15] : memref<98xf32, #tpu.memory_space<smem>>
      %c0_52 = arith.constant 0 : index
      %c110 = arith.constant 110 : index
      %113 = vector.load %arg8[%c0_52, %c110] : memref<1x512xf32, #tpu.memory_space<vmem>>, vector<1x256xf32>
      %114 = vector.broadcast %112 : f32 to vector<1x256xf32>
      %115 = arith.mulf %114, %113 : vector<1x256xf32>
      %116 = arith.addf %106, %115 : vector<1x256xf32>
      %c64 = arith.constant 64 : index
      %117 = memref.load %arg2[%c64] : memref<98xf32, #tpu.memory_space<smem>>
      %c0_53 = arith.constant 0 : index
      %c110_54 = arith.constant 110 : index
      %118 = vector.load %arg9[%c0_53, %c110_54] : memref<1x512xf32, #tpu.memory_space<vmem>>, vector<1x256xf32>
      %119 = vector.broadcast %117 : f32 to vector<1x256xf32>
      %120 = arith.mulf %119, %118 : vector<1x256xf32>
      %121 = arith.addf %111, %120 : vector<1x256xf32>
      %c22 = arith.constant 22 : index
      %122 = memref.load %arg2[%c22] : memref<98xf32, #tpu.memory_space<smem>>
      %c0_55 = arith.constant 0 : index
      %c126 = arith.constant 126 : index
      %123 = vector.load %arg8[%c0_55, %c126] : memref<1x512xf32, #tpu.memory_space<vmem>>, vector<1x256xf32>
      %124 = vector.broadcast %122 : f32 to vector<1x256xf32>
      %125 = arith.mulf %124, %123 : vector<1x256xf32>
      %126 = arith.addf %116, %125 : vector<1x256xf32>
      %c71 = arith.constant 71 : index
      %127 = memref.load %arg2[%c71] : memref<98xf32, #tpu.memory_space<smem>>
      %c0_56 = arith.constant 0 : index
      %c126_57 = arith.constant 126 : index
      %128 = vector.load %arg9[%c0_56, %c126_57] : memref<1x512xf32, #tpu.memory_space<vmem>>, vector<1x256xf32>
      %129 = vector.broadcast %127 : f32 to vector<1x256xf32>
      %130 = arith.mulf %129, %128 : vector<1x256xf32>
      %131 = arith.addf %121, %130 : vector<1x256xf32>
      %c29 = arith.constant 29 : index
      %132 = memref.load %arg2[%c29] : memref<98xf32, #tpu.memory_space<smem>>
      %c0_58 = arith.constant 0 : index
      %c142 = arith.constant 142 : index
      %133 = vector.load %arg8[%c0_58, %c142] : memref<1x512xf32, #tpu.memory_space<vmem>>, vector<1x256xf32>
      %134 = vector.broadcast %132 : f32 to vector<1x256xf32>
      %135 = arith.mulf %134, %133 : vector<1x256xf32>
      %136 = arith.addf %126, %135 : vector<1x256xf32>
      %c78_59 = arith.constant 78 : index
      %137 = memref.load %arg2[%c78_59] : memref<98xf32, #tpu.memory_space<smem>>
      %c0_60 = arith.constant 0 : index
      %c142_61 = arith.constant 142 : index
      %138 = vector.load %arg9[%c0_60, %c142_61] : memref<1x512xf32, #tpu.memory_space<vmem>>, vector<1x256xf32>
      %139 = vector.broadcast %137 : f32 to vector<1x256xf32>
      %140 = arith.mulf %139, %138 : vector<1x256xf32>
      %141 = arith.addf %131, %140 : vector<1x256xf32>
      %c36 = arith.constant 36 : index
      %142 = memref.load %arg2[%c36] : memref<98xf32, #tpu.memory_space<smem>>
      %c0_62 = arith.constant 0 : index
      %c158 = arith.constant 158 : index
      %143 = vector.load %arg8[%c0_62, %c158] : memref<1x512xf32, #tpu.memory_space<vmem>>, vector<1x256xf32>
      %144 = vector.broadcast %142 : f32 to vector<1x256xf32>
      %145 = arith.mulf %144, %143 : vector<1x256xf32>
      %146 = arith.addf %136, %145 : vector<1x256xf32>
      %c85 = arith.constant 85 : index
      %147 = memref.load %arg2[%c85] : memref<98xf32, #tpu.memory_space<smem>>
      %c0_63 = arith.constant 0 : index
      %c158_64 = arith.constant 158 : index
      %148 = vector.load %arg9[%c0_63, %c158_64] : memref<1x512xf32, #tpu.memory_space<vmem>>, vector<1x256xf32>
      %149 = vector.broadcast %147 : f32 to vector<1x256xf32>
      %150 = arith.mulf %149, %148 : vector<1x256xf32>
      %151 = arith.addf %141, %150 : vector<1x256xf32>
      %c43 = arith.constant 43 : index
      %152 = memref.load %arg2[%c43] : memref<98xf32, #tpu.memory_space<smem>>
      %c0_65 = arith.constant 0 : index
      %c174 = arith.constant 174 : index
      %153 = vector.load %arg8[%c0_65, %c174] : memref<1x512xf32, #tpu.memory_space<vmem>>, vector<1x256xf32>
      %154 = vector.broadcast %152 : f32 to vector<1x256xf32>
      %155 = arith.mulf %154, %153 : vector<1x256xf32>
      %156 = arith.addf %146, %155 : vector<1x256xf32>
      %c92 = arith.constant 92 : index
      %157 = memref.load %arg2[%c92] : memref<98xf32, #tpu.memory_space<smem>>
      %c0_66 = arith.constant 0 : index
      %c174_67 = arith.constant 174 : index
      %158 = vector.load %arg9[%c0_66, %c174_67] : memref<1x512xf32, #tpu.memory_space<vmem>>, vector<1x256xf32>
      %159 = vector.broadcast %157 : f32 to vector<1x256xf32>
      %160 = arith.mulf %159, %158 : vector<1x256xf32>
      %161 = arith.addf %151, %160 : vector<1x256xf32>
      %162 = arith.addf %156, %161 : vector<1x256xf32>
      %c1_68 = arith.constant 1 : index
      %c0_69 = arith.constant 0 : index
      %163 = vector.load %arg3[%c1_68, %c0_69] : memref<7x256xf32, #tpu.memory_space<vmem>>, vector<1x256xf32>
      %164 = arith.mulf %162, %163 : vector<1x256xf32>
      %c2 = arith.constant 2 : index
      %165 = memref.load %arg2[%c2] : memref<98xf32, #tpu.memory_space<smem>>
      %c0_70 = arith.constant 0 : index
      %c79 = arith.constant 79 : index
      %166 = vector.load %arg8[%c0_70, %c79] : memref<1x512xf32, #tpu.memory_space<vmem>>, vector<1x256xf32>
      %167 = vector.broadcast %165 : f32 to vector<1x256xf32>
      %168 = arith.mulf %167, %166 : vector<1x256xf32>
      %c51 = arith.constant 51 : index
      %169 = memref.load %arg2[%c51] : memref<98xf32, #tpu.memory_space<smem>>
      %c0_71 = arith.constant 0 : index
      %c79_72 = arith.constant 79 : index
      %170 = vector.load %arg9[%c0_71, %c79_72] : memref<1x512xf32, #tpu.memory_space<vmem>>, vector<1x256xf32>
      %171 = vector.broadcast %169 : f32 to vector<1x256xf32>
      %172 = arith.mulf %171, %170 : vector<1x256xf32>
      %c9 = arith.constant 9 : index
      %173 = memref.load %arg2[%c9] : memref<98xf32, #tpu.memory_space<smem>>
      %c0_73 = arith.constant 0 : index
      %c95 = arith.constant 95 : index
      %174 = vector.load %arg8[%c0_73, %c95] : memref<1x512xf32, #tpu.memory_space<vmem>>, vector<1x256xf32>
      %175 = vector.broadcast %173 : f32 to vector<1x256xf32>
      %176 = arith.mulf %175, %174 : vector<1x256xf32>
      %177 = arith.addf %168, %176 : vector<1x256xf32>
      %c58 = arith.constant 58 : index
      %178 = memref.load %arg2[%c58] : memref<98xf32, #tpu.memory_space<smem>>
      %c0_74 = arith.constant 0 : index
      %c95_75 = arith.constant 95 : index
      %179 = vector.load %arg9[%c0_74, %c95_75] : memref<1x512xf32, #tpu.memory_space<vmem>>, vector<1x256xf32>
      %180 = vector.broadcast %178 : f32 to vector<1x256xf32>
      %181 = arith.mulf %180, %179 : vector<1x256xf32>
      %182 = arith.addf %172, %181 : vector<1x256xf32>
      %c16 = arith.constant 16 : index
      %183 = memref.load %arg2[%c16] : memref<98xf32, #tpu.memory_space<smem>>
      %c0_76 = arith.constant 0 : index
      %c111 = arith.constant 111 : index
      %184 = vector.load %arg8[%c0_76, %c111] : memref<1x512xf32, #tpu.memory_space<vmem>>, vector<1x256xf32>
      %185 = vector.broadcast %183 : f32 to vector<1x256xf32>
      %186 = arith.mulf %185, %184 : vector<1x256xf32>
      %187 = arith.addf %177, %186 : vector<1x256xf32>
      %c65 = arith.constant 65 : index
      %188 = memref.load %arg2[%c65] : memref<98xf32, #tpu.memory_space<smem>>
      %c0_77 = arith.constant 0 : index
      %c111_78 = arith.constant 111 : index
      %189 = vector.load %arg9[%c0_77, %c111_78] : memref<1x512xf32, #tpu.memory_space<vmem>>, vector<1x256xf32>
      %190 = vector.broadcast %188 : f32 to vector<1x256xf32>
      %191 = arith.mulf %190, %189 : vector<1x256xf32>
      %192 = arith.addf %182, %191 : vector<1x256xf32>
      %c23 = arith.constant 23 : index
      %193 = memref.load %arg2[%c23] : memref<98xf32, #tpu.memory_space<smem>>
      %c0_79 = arith.constant 0 : index
      %c127 = arith.constant 127 : index
      %194 = vector.load %arg8[%c0_79, %c127] : memref<1x512xf32, #tpu.memory_space<vmem>>, vector<1x256xf32>
      %195 = vector.broadcast %193 : f32 to vector<1x256xf32>
      %196 = arith.mulf %195, %194 : vector<1x256xf32>
      %197 = arith.addf %187, %196 : vector<1x256xf32>
      %c72 = arith.constant 72 : index
      %198 = memref.load %arg2[%c72] : memref<98xf32, #tpu.memory_space<smem>>
      %c0_80 = arith.constant 0 : index
      %c127_81 = arith.constant 127 : index
      %199 = vector.load %arg9[%c0_80, %c127_81] : memref<1x512xf32, #tpu.memory_space<vmem>>, vector<1x256xf32>
      %200 = vector.broadcast %198 : f32 to vector<1x256xf32>
      %201 = arith.mulf %200, %199 : vector<1x256xf32>
      %202 = arith.addf %192, %201 : vector<1x256xf32>
      %c30 = arith.constant 30 : index
      %203 = memref.load %arg2[%c30] : memref<98xf32, #tpu.memory_space<smem>>
      %c0_82 = arith.constant 0 : index
      %c143 = arith.constant 143 : index
      %204 = vector.load %arg8[%c0_82, %c143] : memref<1x512xf32, #tpu.memory_space<vmem>>, vector<1x256xf32>
      %205 = vector.broadcast %203 : f32 to vector<1x256xf32>
      %206 = arith.mulf %205, %204 : vector<1x256xf32>
      %207 = arith.addf %197, %206 : vector<1x256xf32>
      %c79_83 = arith.constant 79 : index
      %208 = memref.load %arg2[%c79_83] : memref<98xf32, #tpu.memory_space<smem>>
      %c0_84 = arith.constant 0 : index
      %c143_85 = arith.constant 143 : index
      %209 = vector.load %arg9[%c0_84, %c143_85] : memref<1x512xf32, #tpu.memory_space<vmem>>, vector<1x256xf32>
      %210 = vector.broadcast %208 : f32 to vector<1x256xf32>
      %211 = arith.mulf %210, %209 : vector<1x256xf32>
      %212 = arith.addf %202, %211 : vector<1x256xf32>
      %c37 = arith.constant 37 : index
      %213 = memref.load %arg2[%c37] : memref<98xf32, #tpu.memory_space<smem>>
      %c0_86 = arith.constant 0 : index
      %c159 = arith.constant 159 : index
      %214 = vector.load %arg8[%c0_86, %c159] : memref<1x512xf32, #tpu.memory_space<vmem>>, vector<1x256xf32>
      %215 = vector.broadcast %213 : f32 to vector<1x256xf32>
      %216 = arith.mulf %215, %214 : vector<1x256xf32>
      %217 = arith.addf %207, %216 : vector<1x256xf32>
      %c86 = arith.constant 86 : index
      %218 = memref.load %arg2[%c86] : memref<98xf32, #tpu.memory_space<smem>>
      %c0_87 = arith.constant 0 : index
      %c159_88 = arith.constant 159 : index
      %219 = vector.load %arg9[%c0_87, %c159_88] : memref<1x512xf32, #tpu.memory_space<vmem>>, vector<1x256xf32>
      %220 = vector.broadcast %218 : f32 to vector<1x256xf32>
      %221 = arith.mulf %220, %219 : vector<1x256xf32>
      %222 = arith.addf %212, %221 : vector<1x256xf32>
      %c44 = arith.constant 44 : index
      %223 = memref.load %arg2[%c44] : memref<98xf32, #tpu.memory_space<smem>>
      %c0_89 = arith.constant 0 : index
      %c175 = arith.constant 175 : index
      %224 = vector.load %arg8[%c0_89, %c175] : memref<1x512xf32, #tpu.memory_space<vmem>>, vector<1x256xf32>
      %225 = vector.broadcast %223 : f32 to vector<1x256xf32>
      %226 = arith.mulf %225, %224 : vector<1x256xf32>
      %227 = arith.addf %217, %226 : vector<1x256xf32>
      %c93_90 = arith.constant 93 : index
      %228 = memref.load %arg2[%c93_90] : memref<98xf32, #tpu.memory_space<smem>>
      %c0_91 = arith.constant 0 : index
      %c175_92 = arith.constant 175 : index
      %229 = vector.load %arg9[%c0_91, %c175_92] : memref<1x512xf32, #tpu.memory_space<vmem>>, vector<1x256xf32>
      %230 = vector.broadcast %228 : f32 to vector<1x256xf32>
      %231 = arith.mulf %230, %229 : vector<1x256xf32>
      %232 = arith.addf %222, %231 : vector<1x256xf32>
      %233 = arith.addf %227, %232 : vector<1x256xf32>
      %c2_93 = arith.constant 2 : index
      %c0_94 = arith.constant 0 : index
      %234 = vector.load %arg3[%c2_93, %c0_94] : memref<7x256xf32, #tpu.memory_space<vmem>>, vector<1x256xf32>
      %235 = arith.mulf %233, %234 : vector<1x256xf32>
      %c3 = arith.constant 3 : index
      %236 = memref.load %arg2[%c3] : memref<98xf32, #tpu.memory_space<smem>>
      %c0_95 = arith.constant 0 : index
      %c80 = arith.constant 80 : index
      %237 = vector.load %arg8[%c0_95, %c80] : memref<1x512xf32, #tpu.memory_space<vmem>>, vector<1x256xf32>
      %238 = vector.broadcast %236 : f32 to vector<1x256xf32>
      %239 = arith.mulf %238, %237 : vector<1x256xf32>
      %c52 = arith.constant 52 : index
      %240 = memref.load %arg2[%c52] : memref<98xf32, #tpu.memory_space<smem>>
      %c0_96 = arith.constant 0 : index
      %c80_97 = arith.constant 80 : index
      %241 = vector.load %arg9[%c0_96, %c80_97] : memref<1x512xf32, #tpu.memory_space<vmem>>, vector<1x256xf32>
      %242 = vector.broadcast %240 : f32 to vector<1x256xf32>
      %243 = arith.mulf %242, %241 : vector<1x256xf32>
      %c10 = arith.constant 10 : index
      %244 = memref.load %arg2[%c10] : memref<98xf32, #tpu.memory_space<smem>>
      %c0_98 = arith.constant 0 : index
      %c96 = arith.constant 96 : index
      %245 = vector.load %arg8[%c0_98, %c96] : memref<1x512xf32, #tpu.memory_space<vmem>>, vector<1x256xf32>
      %246 = vector.broadcast %244 : f32 to vector<1x256xf32>
      %247 = arith.mulf %246, %245 : vector<1x256xf32>
      %248 = arith.addf %239, %247 : vector<1x256xf32>
      %c59 = arith.constant 59 : index
      %249 = memref.load %arg2[%c59] : memref<98xf32, #tpu.memory_space<smem>>
      %c0_99 = arith.constant 0 : index
      %c96_100 = arith.constant 96 : index
      %250 = vector.load %arg9[%c0_99, %c96_100] : memref<1x512xf32, #tpu.memory_space<vmem>>, vector<1x256xf32>
      %251 = vector.broadcast %249 : f32 to vector<1x256xf32>
      %252 = arith.mulf %251, %250 : vector<1x256xf32>
      %253 = arith.addf %243, %252 : vector<1x256xf32>
      %c17 = arith.constant 17 : index
      %254 = memref.load %arg2[%c17] : memref<98xf32, #tpu.memory_space<smem>>
      %c0_101 = arith.constant 0 : index
      %c112 = arith.constant 112 : index
      %255 = vector.load %arg8[%c0_101, %c112] : memref<1x512xf32, #tpu.memory_space<vmem>>, vector<1x256xf32>
      %256 = vector.broadcast %254 : f32 to vector<1x256xf32>
      %257 = arith.mulf %256, %255 : vector<1x256xf32>
      %258 = arith.addf %248, %257 : vector<1x256xf32>
      %c66 = arith.constant 66 : index
      %259 = memref.load %arg2[%c66] : memref<98xf32, #tpu.memory_space<smem>>
      %c0_102 = arith.constant 0 : index
      %c112_103 = arith.constant 112 : index
      %260 = vector.load %arg9[%c0_102, %c112_103] : memref<1x512xf32, #tpu.memory_space<vmem>>, vector<1x256xf32>
      %261 = vector.broadcast %259 : f32 to vector<1x256xf32>
      %262 = arith.mulf %261, %260 : vector<1x256xf32>
      %263 = arith.addf %253, %262 : vector<1x256xf32>
      %c24 = arith.constant 24 : index
      %264 = memref.load %arg2[%c24] : memref<98xf32, #tpu.memory_space<smem>>
      %c0_104 = arith.constant 0 : index
      %c128_105 = arith.constant 128 : index
      %265 = vector.load %arg8[%c0_104, %c128_105] : memref<1x512xf32, #tpu.memory_space<vmem>>, vector<1x256xf32>
      %266 = vector.broadcast %264 : f32 to vector<1x256xf32>
      %267 = arith.mulf %266, %265 : vector<1x256xf32>
      %268 = arith.addf %258, %267 : vector<1x256xf32>
      %c73 = arith.constant 73 : index
      %269 = memref.load %arg2[%c73] : memref<98xf32, #tpu.memory_space<smem>>
      %c0_106 = arith.constant 0 : index
      %c128_107 = arith.constant 128 : index
      %270 = vector.load %arg9[%c0_106, %c128_107] : memref<1x512xf32, #tpu.memory_space<vmem>>, vector<1x256xf32>
      %271 = vector.broadcast %269 : f32 to vector<1x256xf32>
      %272 = arith.mulf %271, %270 : vector<1x256xf32>
      %273 = arith.addf %263, %272 : vector<1x256xf32>
      %c31 = arith.constant 31 : index
      %274 = memref.load %arg2[%c31] : memref<98xf32, #tpu.memory_space<smem>>
      %c0_108 = arith.constant 0 : index
      %c144 = arith.constant 144 : index
      %275 = vector.load %arg8[%c0_108, %c144] : memref<1x512xf32, #tpu.memory_space<vmem>>, vector<1x256xf32>
      %276 = vector.broadcast %274 : f32 to vector<1x256xf32>
      %277 = arith.mulf %276, %275 : vector<1x256xf32>
      %278 = arith.addf %268, %277 : vector<1x256xf32>
      %c80_109 = arith.constant 80 : index
      %279 = memref.load %arg2[%c80_109] : memref<98xf32, #tpu.memory_space<smem>>
      %c0_110 = arith.constant 0 : index
      %c144_111 = arith.constant 144 : index
      %280 = vector.load %arg9[%c0_110, %c144_111] : memref<1x512xf32, #tpu.memory_space<vmem>>, vector<1x256xf32>
      %281 = vector.broadcast %279 : f32 to vector<1x256xf32>
      %282 = arith.mulf %281, %280 : vector<1x256xf32>
      %283 = arith.addf %273, %282 : vector<1x256xf32>
      %c38 = arith.constant 38 : index
      %284 = memref.load %arg2[%c38] : memref<98xf32, #tpu.memory_space<smem>>
      %c0_112 = arith.constant 0 : index
      %c160 = arith.constant 160 : index
      %285 = vector.load %arg8[%c0_112, %c160] : memref<1x512xf32, #tpu.memory_space<vmem>>, vector<1x256xf32>
      %286 = vector.broadcast %284 : f32 to vector<1x256xf32>
      %287 = arith.mulf %286, %285 : vector<1x256xf32>
      %288 = arith.addf %278, %287 : vector<1x256xf32>
      %c87 = arith.constant 87 : index
      %289 = memref.load %arg2[%c87] : memref<98xf32, #tpu.memory_space<smem>>
      %c0_113 = arith.constant 0 : index
      %c160_114 = arith.constant 160 : index
      %290 = vector.load %arg9[%c0_113, %c160_114] : memref<1x512xf32, #tpu.memory_space<vmem>>, vector<1x256xf32>
      %291 = vector.broadcast %289 : f32 to vector<1x256xf32>
      %292 = arith.mulf %291, %290 : vector<1x256xf32>
      %293 = arith.addf %283, %292 : vector<1x256xf32>
      %c45 = arith.constant 45 : index
      %294 = memref.load %arg2[%c45] : memref<98xf32, #tpu.memory_space<smem>>
      %c0_115 = arith.constant 0 : index
      %c176 = arith.constant 176 : index
      %295 = vector.load %arg8[%c0_115, %c176] : memref<1x512xf32, #tpu.memory_space<vmem>>, vector<1x256xf32>
      %296 = vector.broadcast %294 : f32 to vector<1x256xf32>
      %297 = arith.mulf %296, %295 : vector<1x256xf32>
      %298 = arith.addf %288, %297 : vector<1x256xf32>
      %c94_116 = arith.constant 94 : index
      %299 = memref.load %arg2[%c94_116] : memref<98xf32, #tpu.memory_space<smem>>
      %c0_117 = arith.constant 0 : index
      %c176_118 = arith.constant 176 : index
      %300 = vector.load %arg9[%c0_117, %c176_118] : memref<1x512xf32, #tpu.memory_space<vmem>>, vector<1x256xf32>
      %301 = vector.broadcast %299 : f32 to vector<1x256xf32>
      %302 = arith.mulf %301, %300 : vector<1x256xf32>
      %303 = arith.addf %293, %302 : vector<1x256xf32>
      %304 = arith.addf %298, %303 : vector<1x256xf32>
      %c4 = arith.constant 4 : index
      %305 = memref.load %arg2[%c4] : memref<98xf32, #tpu.memory_space<smem>>
      %c0_119 = arith.constant 0 : index
      %c81 = arith.constant 81 : index
      %306 = vector.load %arg8[%c0_119, %c81] : memref<1x512xf32, #tpu.memory_space<vmem>>, vector<1x256xf32>
      %307 = vector.broadcast %305 : f32 to vector<1x256xf32>
      %308 = arith.mulf %307, %306 : vector<1x256xf32>
      %c53 = arith.constant 53 : index
      %309 = memref.load %arg2[%c53] : memref<98xf32, #tpu.memory_space<smem>>
      %c0_120 = arith.constant 0 : index
      %c81_121 = arith.constant 81 : index
      %310 = vector.load %arg9[%c0_120, %c81_121] : memref<1x512xf32, #tpu.memory_space<vmem>>, vector<1x256xf32>
      %311 = vector.broadcast %309 : f32 to vector<1x256xf32>
      %312 = arith.mulf %311, %310 : vector<1x256xf32>
      %c11 = arith.constant 11 : index
      %313 = memref.load %arg2[%c11] : memref<98xf32, #tpu.memory_space<smem>>
      %c0_122 = arith.constant 0 : index
      %c97 = arith.constant 97 : index
      %314 = vector.load %arg8[%c0_122, %c97] : memref<1x512xf32, #tpu.memory_space<vmem>>, vector<1x256xf32>
      %315 = vector.broadcast %313 : f32 to vector<1x256xf32>
      %316 = arith.mulf %315, %314 : vector<1x256xf32>
      %317 = arith.addf %308, %316 : vector<1x256xf32>
      %c60 = arith.constant 60 : index
      %318 = memref.load %arg2[%c60] : memref<98xf32, #tpu.memory_space<smem>>
      %c0_123 = arith.constant 0 : index
      %c97_124 = arith.constant 97 : index
      %319 = vector.load %arg9[%c0_123, %c97_124] : memref<1x512xf32, #tpu.memory_space<vmem>>, vector<1x256xf32>
      %320 = vector.broadcast %318 : f32 to vector<1x256xf32>
      %321 = arith.mulf %320, %319 : vector<1x256xf32>
      %322 = arith.addf %312, %321 : vector<1x256xf32>
      %c18 = arith.constant 18 : index
      %323 = memref.load %arg2[%c18] : memref<98xf32, #tpu.memory_space<smem>>
      %c0_125 = arith.constant 0 : index
      %c113 = arith.constant 113 : index
      %324 = vector.load %arg8[%c0_125, %c113] : memref<1x512xf32, #tpu.memory_space<vmem>>, vector<1x256xf32>
      %325 = vector.broadcast %323 : f32 to vector<1x256xf32>
      %326 = arith.mulf %325, %324 : vector<1x256xf32>
      %327 = arith.addf %317, %326 : vector<1x256xf32>
      %c67 = arith.constant 67 : index
      %328 = memref.load %arg2[%c67] : memref<98xf32, #tpu.memory_space<smem>>
      %c0_126 = arith.constant 0 : index
      %c113_127 = arith.constant 113 : index
      %329 = vector.load %arg9[%c0_126, %c113_127] : memref<1x512xf32, #tpu.memory_space<vmem>>, vector<1x256xf32>
      %330 = vector.broadcast %328 : f32 to vector<1x256xf32>
      %331 = arith.mulf %330, %329 : vector<1x256xf32>
      %332 = arith.addf %322, %331 : vector<1x256xf32>
      %c25 = arith.constant 25 : index
      %333 = memref.load %arg2[%c25] : memref<98xf32, #tpu.memory_space<smem>>
      %c0_128 = arith.constant 0 : index
      %c129 = arith.constant 129 : index
      %334 = vector.load %arg8[%c0_128, %c129] : memref<1x512xf32, #tpu.memory_space<vmem>>, vector<1x256xf32>
      %335 = vector.broadcast %333 : f32 to vector<1x256xf32>
      %336 = arith.mulf %335, %334 : vector<1x256xf32>
      %337 = arith.addf %327, %336 : vector<1x256xf32>
      %c74 = arith.constant 74 : index
      %338 = memref.load %arg2[%c74] : memref<98xf32, #tpu.memory_space<smem>>
      %c0_129 = arith.constant 0 : index
      %c129_130 = arith.constant 129 : index
      %339 = vector.load %arg9[%c0_129, %c129_130] : memref<1x512xf32, #tpu.memory_space<vmem>>, vector<1x256xf32>
      %340 = vector.broadcast %338 : f32 to vector<1x256xf32>
      %341 = arith.mulf %340, %339 : vector<1x256xf32>
      %342 = arith.addf %332, %341 : vector<1x256xf32>
      %c32 = arith.constant 32 : index
      %343 = memref.load %arg2[%c32] : memref<98xf32, #tpu.memory_space<smem>>
      %c0_131 = arith.constant 0 : index
      %c145 = arith.constant 145 : index
      %344 = vector.load %arg8[%c0_131, %c145] : memref<1x512xf32, #tpu.memory_space<vmem>>, vector<1x256xf32>
      %345 = vector.broadcast %343 : f32 to vector<1x256xf32>
      %346 = arith.mulf %345, %344 : vector<1x256xf32>
      %347 = arith.addf %337, %346 : vector<1x256xf32>
      %c81_132 = arith.constant 81 : index
      %348 = memref.load %arg2[%c81_132] : memref<98xf32, #tpu.memory_space<smem>>
      %c0_133 = arith.constant 0 : index
      %c145_134 = arith.constant 145 : index
      %349 = vector.load %arg9[%c0_133, %c145_134] : memref<1x512xf32, #tpu.memory_space<vmem>>, vector<1x256xf32>
      %350 = vector.broadcast %348 : f32 to vector<1x256xf32>
      %351 = arith.mulf %350, %349 : vector<1x256xf32>
      %352 = arith.addf %342, %351 : vector<1x256xf32>
      %c39 = arith.constant 39 : index
      %353 = memref.load %arg2[%c39] : memref<98xf32, #tpu.memory_space<smem>>
      %c0_135 = arith.constant 0 : index
      %c161 = arith.constant 161 : index
      %354 = vector.load %arg8[%c0_135, %c161] : memref<1x512xf32, #tpu.memory_space<vmem>>, vector<1x256xf32>
      %355 = vector.broadcast %353 : f32 to vector<1x256xf32>
      %356 = arith.mulf %355, %354 : vector<1x256xf32>
      %357 = arith.addf %347, %356 : vector<1x256xf32>
      %c88 = arith.constant 88 : index
      %358 = memref.load %arg2[%c88] : memref<98xf32, #tpu.memory_space<smem>>
      %c0_136 = arith.constant 0 : index
      %c161_137 = arith.constant 161 : index
      %359 = vector.load %arg9[%c0_136, %c161_137] : memref<1x512xf32, #tpu.memory_space<vmem>>, vector<1x256xf32>
      %360 = vector.broadcast %358 : f32 to vector<1x256xf32>
      %361 = arith.mulf %360, %359 : vector<1x256xf32>
      %362 = arith.addf %352, %361 : vector<1x256xf32>
      %c46 = arith.constant 46 : index
      %363 = memref.load %arg2[%c46] : memref<98xf32, #tpu.memory_space<smem>>
      %c0_138 = arith.constant 0 : index
      %c177 = arith.constant 177 : index
      %364 = vector.load %arg8[%c0_138, %c177] : memref<1x512xf32, #tpu.memory_space<vmem>>, vector<1x256xf32>
      %365 = vector.broadcast %363 : f32 to vector<1x256xf32>
      %366 = arith.mulf %365, %364 : vector<1x256xf32>
      %367 = arith.addf %357, %366 : vector<1x256xf32>
      %c95_139 = arith.constant 95 : index
      %368 = memref.load %arg2[%c95_139] : memref<98xf32, #tpu.memory_space<smem>>
      %c0_140 = arith.constant 0 : index
      %c177_141 = arith.constant 177 : index
      %369 = vector.load %arg9[%c0_140, %c177_141] : memref<1x512xf32, #tpu.memory_space<vmem>>, vector<1x256xf32>
      %370 = vector.broadcast %368 : f32 to vector<1x256xf32>
      %371 = arith.mulf %370, %369 : vector<1x256xf32>
      %372 = arith.addf %362, %371 : vector<1x256xf32>
      %373 = arith.addf %367, %372 : vector<1x256xf32>
      %c4_142 = arith.constant 4 : index
      %c0_143 = arith.constant 0 : index
      %374 = vector.load %arg3[%c4_142, %c0_143] : memref<7x256xf32, #tpu.memory_space<vmem>>, vector<1x256xf32>
      %375 = arith.mulf %373, %374 : vector<1x256xf32>
      %c5 = arith.constant 5 : index
      %376 = memref.load %arg2[%c5] : memref<98xf32, #tpu.memory_space<smem>>
      %c0_144 = arith.constant 0 : index
      %c82 = arith.constant 82 : index
      %377 = vector.load %arg8[%c0_144, %c82] : memref<1x512xf32, #tpu.memory_space<vmem>>, vector<1x256xf32>
      %378 = vector.broadcast %376 : f32 to vector<1x256xf32>
      %379 = arith.mulf %378, %377 : vector<1x256xf32>
      %c54 = arith.constant 54 : index
      %380 = memref.load %arg2[%c54] : memref<98xf32, #tpu.memory_space<smem>>
      %c0_145 = arith.constant 0 : index
      %c82_146 = arith.constant 82 : index
      %381 = vector.load %arg9[%c0_145, %c82_146] : memref<1x512xf32, #tpu.memory_space<vmem>>, vector<1x256xf32>
      %382 = vector.broadcast %380 : f32 to vector<1x256xf32>
      %383 = arith.mulf %382, %381 : vector<1x256xf32>
      %c12 = arith.constant 12 : index
      %384 = memref.load %arg2[%c12] : memref<98xf32, #tpu.memory_space<smem>>
      %c0_147 = arith.constant 0 : index
      %c98 = arith.constant 98 : index
      %385 = vector.load %arg8[%c0_147, %c98] : memref<1x512xf32, #tpu.memory_space<vmem>>, vector<1x256xf32>
      %386 = vector.broadcast %384 : f32 to vector<1x256xf32>
      %387 = arith.mulf %386, %385 : vector<1x256xf32>
      %388 = arith.addf %379, %387 : vector<1x256xf32>
      %c61 = arith.constant 61 : index
      %389 = memref.load %arg2[%c61] : memref<98xf32, #tpu.memory_space<smem>>
      %c0_148 = arith.constant 0 : index
      %c98_149 = arith.constant 98 : index
      %390 = vector.load %arg9[%c0_148, %c98_149] : memref<1x512xf32, #tpu.memory_space<vmem>>, vector<1x256xf32>
      %391 = vector.broadcast %389 : f32 to vector<1x256xf32>
      %392 = arith.mulf %391, %390 : vector<1x256xf32>
      %393 = arith.addf %383, %392 : vector<1x256xf32>
      %c19 = arith.constant 19 : index
      %394 = memref.load %arg2[%c19] : memref<98xf32, #tpu.memory_space<smem>>
      %c0_150 = arith.constant 0 : index
      %c114 = arith.constant 114 : index
      %395 = vector.load %arg8[%c0_150, %c114] : memref<1x512xf32, #tpu.memory_space<vmem>>, vector<1x256xf32>
      %396 = vector.broadcast %394 : f32 to vector<1x256xf32>
      %397 = arith.mulf %396, %395 : vector<1x256xf32>
      %398 = arith.addf %388, %397 : vector<1x256xf32>
      %c68 = arith.constant 68 : index
      %399 = memref.load %arg2[%c68] : memref<98xf32, #tpu.memory_space<smem>>
      %c0_151 = arith.constant 0 : index
      %c114_152 = arith.constant 114 : index
      %400 = vector.load %arg9[%c0_151, %c114_152] : memref<1x512xf32, #tpu.memory_space<vmem>>, vector<1x256xf32>
      %401 = vector.broadcast %399 : f32 to vector<1x256xf32>
      %402 = arith.mulf %401, %400 : vector<1x256xf32>
      %403 = arith.addf %393, %402 : vector<1x256xf32>
      %c26 = arith.constant 26 : index
      %404 = memref.load %arg2[%c26] : memref<98xf32, #tpu.memory_space<smem>>
      %c0_153 = arith.constant 0 : index
      %c130 = arith.constant 130 : index
      %405 = vector.load %arg8[%c0_153, %c130] : memref<1x512xf32, #tpu.memory_space<vmem>>, vector<1x256xf32>
      %406 = vector.broadcast %404 : f32 to vector<1x256xf32>
      %407 = arith.mulf %406, %405 : vector<1x256xf32>
      %408 = arith.addf %398, %407 : vector<1x256xf32>
      %c75 = arith.constant 75 : index
      %409 = memref.load %arg2[%c75] : memref<98xf32, #tpu.memory_space<smem>>
      %c0_154 = arith.constant 0 : index
      %c130_155 = arith.constant 130 : index
      %410 = vector.load %arg9[%c0_154, %c130_155] : memref<1x512xf32, #tpu.memory_space<vmem>>, vector<1x256xf32>
      %411 = vector.broadcast %409 : f32 to vector<1x256xf32>
      %412 = arith.mulf %411, %410 : vector<1x256xf32>
      %413 = arith.addf %403, %412 : vector<1x256xf32>
      %c33 = arith.constant 33 : index
      %414 = memref.load %arg2[%c33] : memref<98xf32, #tpu.memory_space<smem>>
      %c0_156 = arith.constant 0 : index
      %c146 = arith.constant 146 : index
      %415 = vector.load %arg8[%c0_156, %c146] : memref<1x512xf32, #tpu.memory_space<vmem>>, vector<1x256xf32>
      %416 = vector.broadcast %414 : f32 to vector<1x256xf32>
      %417 = arith.mulf %416, %415 : vector<1x256xf32>
      %418 = arith.addf %408, %417 : vector<1x256xf32>
      %c82_157 = arith.constant 82 : index
      %419 = memref.load %arg2[%c82_157] : memref<98xf32, #tpu.memory_space<smem>>
      %c0_158 = arith.constant 0 : index
      %c146_159 = arith.constant 146 : index
      %420 = vector.load %arg9[%c0_158, %c146_159] : memref<1x512xf32, #tpu.memory_space<vmem>>, vector<1x256xf32>
      %421 = vector.broadcast %419 : f32 to vector<1x256xf32>
      %422 = arith.mulf %421, %420 : vector<1x256xf32>
      %423 = arith.addf %413, %422 : vector<1x256xf32>
      %c40 = arith.constant 40 : index
      %424 = memref.load %arg2[%c40] : memref<98xf32, #tpu.memory_space<smem>>
      %c0_160 = arith.constant 0 : index
      %c162 = arith.constant 162 : index
      %425 = vector.load %arg8[%c0_160, %c162] : memref<1x512xf32, #tpu.memory_space<vmem>>, vector<1x256xf32>
      %426 = vector.broadcast %424 : f32 to vector<1x256xf32>
      %427 = arith.mulf %426, %425 : vector<1x256xf32>
      %428 = arith.addf %418, %427 : vector<1x256xf32>
      %c89 = arith.constant 89 : index
      %429 = memref.load %arg2[%c89] : memref<98xf32, #tpu.memory_space<smem>>
      %c0_161 = arith.constant 0 : index
      %c162_162 = arith.constant 162 : index
      %430 = vector.load %arg9[%c0_161, %c162_162] : memref<1x512xf32, #tpu.memory_space<vmem>>, vector<1x256xf32>
      %431 = vector.broadcast %429 : f32 to vector<1x256xf32>
      %432 = arith.mulf %431, %430 : vector<1x256xf32>
      %433 = arith.addf %423, %432 : vector<1x256xf32>
      %c47 = arith.constant 47 : index
      %434 = memref.load %arg2[%c47] : memref<98xf32, #tpu.memory_space<smem>>
      %c0_163 = arith.constant 0 : index
      %c178 = arith.constant 178 : index
      %435 = vector.load %arg8[%c0_163, %c178] : memref<1x512xf32, #tpu.memory_space<vmem>>, vector<1x256xf32>
      %436 = vector.broadcast %434 : f32 to vector<1x256xf32>
      %437 = arith.mulf %436, %435 : vector<1x256xf32>
      %438 = arith.addf %428, %437 : vector<1x256xf32>
      %c96_164 = arith.constant 96 : index
      %439 = memref.load %arg2[%c96_164] : memref<98xf32, #tpu.memory_space<smem>>
      %c0_165 = arith.constant 0 : index
      %c178_166 = arith.constant 178 : index
      %440 = vector.load %arg9[%c0_165, %c178_166] : memref<1x512xf32, #tpu.memory_space<vmem>>, vector<1x256xf32>
      %441 = vector.broadcast %439 : f32 to vector<1x256xf32>
      %442 = arith.mulf %441, %440 : vector<1x256xf32>
      %443 = arith.addf %433, %442 : vector<1x256xf32>
      %444 = arith.addf %438, %443 : vector<1x256xf32>
      %c5_167 = arith.constant 5 : index
      %c0_168 = arith.constant 0 : index
      %445 = vector.load %arg3[%c5_167, %c0_168] : memref<7x256xf32, #tpu.memory_space<vmem>>, vector<1x256xf32>
      %446 = arith.mulf %444, %445 : vector<1x256xf32>
      %c6 = arith.constant 6 : index
      %447 = memref.load %arg2[%c6] : memref<98xf32, #tpu.memory_space<smem>>
      %c0_169 = arith.constant 0 : index
      %c83 = arith.constant 83 : index
      %448 = vector.load %arg8[%c0_169, %c83] : memref<1x512xf32, #tpu.memory_space<vmem>>, vector<1x256xf32>
      %449 = vector.broadcast %447 : f32 to vector<1x256xf32>
      %450 = arith.mulf %449, %448 : vector<1x256xf32>
      %c55 = arith.constant 55 : index
      %451 = memref.load %arg2[%c55] : memref<98xf32, #tpu.memory_space<smem>>
      %c0_170 = arith.constant 0 : index
      %c83_171 = arith.constant 83 : index
      %452 = vector.load %arg9[%c0_170, %c83_171] : memref<1x512xf32, #tpu.memory_space<vmem>>, vector<1x256xf32>
      %453 = vector.broadcast %451 : f32 to vector<1x256xf32>
      %454 = arith.mulf %453, %452 : vector<1x256xf32>
      %c13 = arith.constant 13 : index
      %455 = memref.load %arg2[%c13] : memref<98xf32, #tpu.memory_space<smem>>
      %c0_172 = arith.constant 0 : index
      %c99 = arith.constant 99 : index
      %456 = vector.load %arg8[%c0_172, %c99] : memref<1x512xf32, #tpu.memory_space<vmem>>, vector<1x256xf32>
      %457 = vector.broadcast %455 : f32 to vector<1x256xf32>
      %458 = arith.mulf %457, %456 : vector<1x256xf32>
      %459 = arith.addf %450, %458 : vector<1x256xf32>
      %c62 = arith.constant 62 : index
      %460 = memref.load %arg2[%c62] : memref<98xf32, #tpu.memory_space<smem>>
      %c0_173 = arith.constant 0 : index
      %c99_174 = arith.constant 99 : index
      %461 = vector.load %arg9[%c0_173, %c99_174] : memref<1x512xf32, #tpu.memory_space<vmem>>, vector<1x256xf32>
      %462 = vector.broadcast %460 : f32 to vector<1x256xf32>
      %463 = arith.mulf %462, %461 : vector<1x256xf32>
      %464 = arith.addf %454, %463 : vector<1x256xf32>
      %c20 = arith.constant 20 : index
      %465 = memref.load %arg2[%c20] : memref<98xf32, #tpu.memory_space<smem>>
      %c0_175 = arith.constant 0 : index
      %c115 = arith.constant 115 : index
      %466 = vector.load %arg8[%c0_175, %c115] : memref<1x512xf32, #tpu.memory_space<vmem>>, vector<1x256xf32>
      %467 = vector.broadcast %465 : f32 to vector<1x256xf32>
      %468 = arith.mulf %467, %466 : vector<1x256xf32>
      %469 = arith.addf %459, %468 : vector<1x256xf32>
      %c69 = arith.constant 69 : index
      %470 = memref.load %arg2[%c69] : memref<98xf32, #tpu.memory_space<smem>>
      %c0_176 = arith.constant 0 : index
      %c115_177 = arith.constant 115 : index
      %471 = vector.load %arg9[%c0_176, %c115_177] : memref<1x512xf32, #tpu.memory_space<vmem>>, vector<1x256xf32>
      %472 = vector.broadcast %470 : f32 to vector<1x256xf32>
      %473 = arith.mulf %472, %471 : vector<1x256xf32>
      %474 = arith.addf %464, %473 : vector<1x256xf32>
      %c27 = arith.constant 27 : index
      %475 = memref.load %arg2[%c27] : memref<98xf32, #tpu.memory_space<smem>>
      %c0_178 = arith.constant 0 : index
      %c131 = arith.constant 131 : index
      %476 = vector.load %arg8[%c0_178, %c131] : memref<1x512xf32, #tpu.memory_space<vmem>>, vector<1x256xf32>
      %477 = vector.broadcast %475 : f32 to vector<1x256xf32>
      %478 = arith.mulf %477, %476 : vector<1x256xf32>
      %479 = arith.addf %469, %478 : vector<1x256xf32>
      %c76 = arith.constant 76 : index
      %480 = memref.load %arg2[%c76] : memref<98xf32, #tpu.memory_space<smem>>
      %c0_179 = arith.constant 0 : index
      %c131_180 = arith.constant 131 : index
      %481 = vector.load %arg9[%c0_179, %c131_180] : memref<1x512xf32, #tpu.memory_space<vmem>>, vector<1x256xf32>
      %482 = vector.broadcast %480 : f32 to vector<1x256xf32>
      %483 = arith.mulf %482, %481 : vector<1x256xf32>
      %484 = arith.addf %474, %483 : vector<1x256xf32>
      %c34 = arith.constant 34 : index
      %485 = memref.load %arg2[%c34] : memref<98xf32, #tpu.memory_space<smem>>
      %c0_181 = arith.constant 0 : index
      %c147 = arith.constant 147 : index
      %486 = vector.load %arg8[%c0_181, %c147] : memref<1x512xf32, #tpu.memory_space<vmem>>, vector<1x256xf32>
      %487 = vector.broadcast %485 : f32 to vector<1x256xf32>
      %488 = arith.mulf %487, %486 : vector<1x256xf32>
      %489 = arith.addf %479, %488 : vector<1x256xf32>
      %c83_182 = arith.constant 83 : index
      %490 = memref.load %arg2[%c83_182] : memref<98xf32, #tpu.memory_space<smem>>
      %c0_183 = arith.constant 0 : index
      %c147_184 = arith.constant 147 : index
      %491 = vector.load %arg9[%c0_183, %c147_184] : memref<1x512xf32, #tpu.memory_space<vmem>>, vector<1x256xf32>
      %492 = vector.broadcast %490 : f32 to vector<1x256xf32>
      %493 = arith.mulf %492, %491 : vector<1x256xf32>
      %494 = arith.addf %484, %493 : vector<1x256xf32>
      %c41 = arith.constant 41 : index
      %495 = memref.load %arg2[%c41] : memref<98xf32, #tpu.memory_space<smem>>
      %c0_185 = arith.constant 0 : index
      %c163 = arith.constant 163 : index
      %496 = vector.load %arg8[%c0_185, %c163] : memref<1x512xf32, #tpu.memory_space<vmem>>, vector<1x256xf32>
      %497 = vector.broadcast %495 : f32 to vector<1x256xf32>
      %498 = arith.mulf %497, %496 : vector<1x256xf32>
      %499 = arith.addf %489, %498 : vector<1x256xf32>
      %c90 = arith.constant 90 : index
      %500 = memref.load %arg2[%c90] : memref<98xf32, #tpu.memory_space<smem>>
      %c0_186 = arith.constant 0 : index
      %c163_187 = arith.constant 163 : index
      %501 = vector.load %arg9[%c0_186, %c163_187] : memref<1x512xf32, #tpu.memory_space<vmem>>, vector<1x256xf32>
      %502 = vector.broadcast %500 : f32 to vector<1x256xf32>
      %503 = arith.mulf %502, %501 : vector<1x256xf32>
      %504 = arith.addf %494, %503 : vector<1x256xf32>
      %c48 = arith.constant 48 : index
      %505 = memref.load %arg2[%c48] : memref<98xf32, #tpu.memory_space<smem>>
      %c0_188 = arith.constant 0 : index
      %c179 = arith.constant 179 : index
      %506 = vector.load %arg8[%c0_188, %c179] : memref<1x512xf32, #tpu.memory_space<vmem>>, vector<1x256xf32>
      %507 = vector.broadcast %505 : f32 to vector<1x256xf32>
      %508 = arith.mulf %507, %506 : vector<1x256xf32>
      %509 = arith.addf %499, %508 : vector<1x256xf32>
      %c97_189 = arith.constant 97 : index
      %510 = memref.load %arg2[%c97_189] : memref<98xf32, #tpu.memory_space<smem>>
      %c0_190 = arith.constant 0 : index
      %c179_191 = arith.constant 179 : index
      %511 = vector.load %arg9[%c0_190, %c179_191] : memref<1x512xf32, #tpu.memory_space<vmem>>, vector<1x256xf32>
      %512 = vector.broadcast %510 : f32 to vector<1x256xf32>
      %513 = arith.mulf %512, %511 : vector<1x256xf32>
      %514 = arith.addf %504, %513 : vector<1x256xf32>
      %515 = arith.addf %509, %514 : vector<1x256xf32>
      %c6_192 = arith.constant 6 : index
      %c0_193 = arith.constant 0 : index
      %516 = vector.load %arg3[%c6_192, %c0_193] : memref<7x256xf32, #tpu.memory_space<vmem>>, vector<1x256xf32>
      %517 = arith.mulf %515, %516 : vector<1x256xf32>
      %518 = arith.addf %93, %164 : vector<1x256xf32>
      %519 = arith.addf %235, %304 : vector<1x256xf32>
      %520 = arith.addf %375, %446 : vector<1x256xf32>
      %521 = arith.addf %518, %519 : vector<1x256xf32>
      %522 = arith.addf %520, %517 : vector<1x256xf32>
      %523 = arith.addf %521, %522 : vector<1x256xf32>
      %524 = arith.negf %523 : vector<1x256xf32>
      %525 = math.exp %524 : vector<1x256xf32>
      %cst_194 = arith.constant 1.000000e+00 : f32
      %526 = vector.broadcast %cst_194 : f32 to vector<1x256xf32>
      %527 = arith.addf %526, %525 : vector<1x256xf32>
      %528 = arith.divf %526, %527 : vector<1x256xf32>
      %c0_195 = arith.constant 0 : index
      %c0_196 = arith.constant 0 : index
      %c0_197 = arith.constant 0 : index
      %529 = vector.load %arg5[%c0_195, %c0_196, %c0_197] : memref<1x1x256xf32, #tpu.memory_space<vmem>>, vector<1x1x256xf32>
      %530 = vector.shape_cast %529 : vector<1x1x256xf32> to vector<1x256xf32>
      %531 = vector.shape_cast %528 : vector<1x256xf32> to vector<1x1x256xf32>
      tpu.vector_store %arg5[%c0_195, %c0_196, %c0_197], %531 {strides = array<i32>} : memref<1x1x256xf32, #tpu.memory_space<vmem>>, vector<1x1x256xf32>,
    } else {
    }
    return
  }
  func.func @transform_0(%arg0: i32, %arg1: i32) -> i32 {
    %c0_i32 = arith.constant 0 : i32
    %c0_i32_0 = arith.constant 0 : i32
    return %c0_i32 : i32
  }
  func.func @transform_1(%arg0: i32, %arg1: i32) -> (i32, i32) {
    %c0_i32 = arith.constant 0 : i32
    %c0_i32_0 = arith.constant 0 : i32
    %c0_i32_1 = arith.constant 0 : i32
    return %c0_i32, %c0_i32_0 : i32, i32
  }
  func.func @transform_2(%arg0: i32, %arg1: i32) -> (i32, i32, i32) {
    %c0_i32 = arith.constant 0 : i32
    %c0_i32_0 = arith.constant 0 : i32
    return %arg0, %arg1, %c0_i32 : i32, i32, i32
  }
  func.func @transform_3(%arg0: i32, %arg1: i32) -> (i32, i32, i32) {
    %c0_i32 = arith.constant 0 : i32
    %c0_i32_0 = arith.constant 0 : i32
    %c0_i32_1 = arith.constant 0 : i32
    return %arg0, %c0_i32, %c0_i32_0 : i32, i32, i32
  }
}

</mosaic_0001>

<llo_original>
// kernel: tpu_custom_call.1
$region0: #{tpu_custom_call.1}
  #allocation0 [shape = 'u32[]', space=smem, size = 0x4, offset = 0x4, fixed_abs, tag = 'smem constant byte address 0x4 - core index']
  #allocation1 [shape = 'u32[144,128]{1,0:T(1,128)}', space=vmem, size = 0x12000, scoped, tag = 'internal scratch']
  #allocation2 [shape = 'f32[1,256]{1,0:T(1,128)}', space=vmem, size = 0x400, scoped, tag = 'scratch operand']
  #allocation3 [shape = 'f32[1,256]{1,0:T(1,128)}', space=vmem, size = 0x400, scoped, tag = 'scratch operand']
  #allocation4 [shape = 'f32[1,512]{1,0:T(1,128)}', space=vmem, size = 0x800, scoped, tag = 'scratch operand']
  #allocation5 [shape = 'f32[1,512]{1,0:T(1,128)}', space=vmem, size = 0x800, scoped, tag = 'scratch operand']
  %s0 = inlined_call_operand.hbm [shape: f32[98], index: 0, kind: input, shape index: {}]
  %s1 = inlined_call_operand.hbm [shape: f32[7,256], index: 1, kind: input, shape index: {}]
  %s2 = inlined_call_operand.hbm [shape: f32[2,4,256], index: 2, kind: input, shape index: {}]
  %s3 = inlined_call_operand.hbm [shape: f32[2,1,256], index: 3, kind: output, shape index: {}]
  %s4 = sld [smem:[#allocation0]]
  $region69: #{tpu_custom_call.1} parent=0
    _
  %s6 = ssub.s32 1, %s4
  %s7 = scalar_select 0, %s6, %s4
  $region1: #{tpu_custom_call.1} parent=0
    #allocation6 [shape = 'u8[512]{0}', space=smem, size = 0x200, scoped, tag = 'input window, operand 0, single buffered']
    #allocation7 [shape = 's32[2]{0}', space=sflag, size = 0x8, scoped, tag = 'scoped memory for tpu_custom_call.1']
    #allocation8 [shape = 's32[2]{0}', space=sflag, size = 0x8, scoped, tag = 'scoped memory for tpu_custom_call.1']
    #allocation9 [shape = 's32[2]{0}', space=sflag, size = 0x8, scoped, tag = 'scoped memory for tpu_custom_call.1']
    #allocation10 [shape = 'u8[8192]{0}', space=vmem, size = 0x2000, scoped, tag = 'input window, operand 1, single buffered']
    #allocation11 [shape = 'u8[8192]{0}', space=vmem, size = 0x2000, scoped, tag = 'input window, operand 2']
    #allocation12 [shape = 's32[2]{0}', space=sflag, size = 0x8, scoped, tag = 'scoped memory for tpu_custom_call.1']
    #allocation13 [shape = 'u8[2048]{0}', space=vmem, size = 0x800, scoped, tag = 'output window, operand 0']
    %8 = vsyncpa [#allocation9], 0
    %9 = vsyncpa [#allocation7], 0
    %10 = vsyncpa [#allocation12], 0
    %s11 = scalar_lea.sflag [#allocation12], 1
    %12 = vsyncpa %s11, 0
    %13 = vsyncpa [#allocation8], 0
    %s14 = scalar_lea.sflag [#allocation8], 1
    %15 = vsyncpa %s14, 0
    loop: start=0, step=1, limit=4
    $region2: #{tpu_custom_call.1} parent=1 // loop_pre_header
      _
    $region3: #{tpu_custom_call.1} parent=1 // loop_header
      %s17 = sphi 0, %s21
      %p18 = scmp.ge.s32.totalorder %s17, 4
      %s24 = sphi 0, %s36
      %s25 = sphi 0, %s32
      %s26 = sphi 0, %s24
      %s27 = sphi 0, %s25
      %s28 = sphi 0, %s26
      %s29 = sphi 0, %s27
      %s37 = sphi 0, %s37
      %s39 = sphi 0, %s37
      %s40 = sphi 0, %s39
      %s54 = sphi 0, %s40
      %s58 = sphi 0, %s58
      %s60 = sphi 0, %s58
      %s61 = sphi 0, %s60
      %s75 = sphi 0, %s61
      %s83 = sphi 0, %s85
      %s86 = sphi 0, %s83
      %s87 = sphi 0, %s86
      %s103 = sphi 0, %s87
      %s109 = sphi 0, %s111
      %s112 = sphi 0, %s109
      %s113 = sphi 0, %s112
      %s129 = sphi 0, %s113
    $region4: #{tpu_custom_call.1} parent=1 // loop_header_branch
      %20 = sbr.rel (%p18) target = $region8
    $region5: #{tpu_custom_call.1} parent=1 // loop_body
      %s22 = ssub.s32 %s17, 1
      %s23 = ssub.s32 %s17, 2
      %s30 = sadd.s32 1, %s25
      %p31 = scmp.ge.s32.totalorder %s30, 1
      %s32 = scalar_select %p31, 0, %s30
      %s33 = sadd.s32 1, %s24
      %s34 = scalar_select %p31, %s33, %s24
      %p35 = scmp.ge.s32.totalorder %s34, 2
      %s36 = scalar_select %p35, 0, %s34
      %s38 = sadd.s32 %s37, 1
      %p41 = scmp.eq.s32.totalorder %s17, 1
      %p42 = scmp.ne.s32.totalorder %s37, %s39
      %p43 = scmp.eq.s32.totalorder %s17, 0
      %p44 = por %p42, %p43
      %p45 = scmp.ne.s32.totalorder %s37, %s39
      %p46 = scmp.eq.s32.totalorder %s22, 1
      %p47 = por %p45, %p46
      %p48 = scmp.ne.s32.totalorder %s39, %s40
      %p49 = scmp.eq.s32.totalorder %s22, 0
      %p50 = por %p48, %p49
      %p51 = scmp.ne.s32.totalorder %s39, %s40
      %p52 = scmp.eq.s32.totalorder %s23, 1
      %p53 = por %p51, %p52
      %p55 = scmp.ne.s32.totalorder %s40, %s54
      %p56 = scmp.eq.s32.totalorder %s23, 0
      %p57 = por %p55, %p56
      %s59 = sadd.s32 %s58, 1
      %p62 = scmp.eq.s32.totalorder %s17, 1
      %p63 = scmp.ne.s32.totalorder %s58, %s60
      %p64 = scmp.eq.s32.totalorder %s17, 0
      %p65 = por %p63, %p64
      %p66 = scmp.ne.s32.totalorder %s58, %s60
      %p67 = scmp.eq.s32.totalorder %s22, 1
      %p68 = por %p66, %p67
      %p69 = scmp.ne.s32.totalorder %s60, %s61
      %p70 = scmp.eq.s32.totalorder %s22, 0
      %p71 = por %p69, %p70
      %p72 = scmp.ne.s32.totalorder %s60, %s61
      %p73 = scmp.eq.s32.totalorder %s23, 1
      %p74 = por %p72, %p73
      %p76 = scmp.ne.s32.totalorder %s61, %s75
      %p77 = scmp.eq.s32.totalorder %s23, 0
      %p78 = por %p76, %p77
      %s79 = ssub.s32 %s24, %s36
      %s80 = ssub.s32 %s25, %s32
      %s81 = sor.u32 %s79, %s80
      %p82 = scmp.eq.s32.totalorder %s81, 0
      %s84 = sadd.s32 %s83, 1
      %s85 = scalar_select %p82, %s83, %s84
      %p88 = pneg %p82
      %p89 = scmp.eq.s32.totalorder %s17, 1
      %p90 = por %p88, %p89
      %p91 = scmp.ne.s32.totalorder %s83, %s86
      %p92 = scmp.eq.s32.totalorder %s17, 0
      %p93 = por %p91, %p92
      %p94 = scmp.ne.s32.totalorder %s83, %s86
      %p95 = scmp.eq.s32.totalorder %s22, 1
      %p96 = por %p94, %p95
      %p97 = scmp.ne.s32.totalorder %s86, %s87
      %p98 = scmp.eq.s32.totalorder %s22, 0
      %p99 = por %p97, %p98
      %p100 = scmp.ne.s32.totalorder %s86, %s87
      %p101 = scmp.eq.s32.totalorder %s23, 1
      %p102 = por %p100, %p101
      %p104 = scmp.ne.s32.totalorder %s87, %s103
      %p105 = scmp.eq.s32.totalorder %s23, 0
      %p106 = por %p104, %p105
      %s107 = ssub.s32 %s24, %s36
      %p108 = scmp.eq.s32.totalorder %s107, 0
      %s110 = sadd.s32 %s109, 1
      %s111 = scalar_select %p108, %s109, %s110
      %p114 = pneg %p108
      %p115 = scmp.eq.s32.totalorder %s17, 1
      %p116 = por %p114, %p115
      %p117 = scmp.ne.s32.totalorder %s109, %s112
      %p118 = scmp.eq.s32.totalorder %s17, 0
      %p119 = por %p117, %p118
      %p120 = scmp.ne.s32.totalorder %s109, %s112
      %p121 = scmp.eq.s32.totalorder %s22, 1
      %p122 = por %p120, %p121
      %p123 = scmp.ne.s32.totalorder %s112, %s113
      %p124 = scmp.eq.s32.totalorder %s22, 0
      %p125 = por %p123, %p124
      %p126 = scmp.ne.s32.totalorder %s112, %s113
      %p127 = scmp.eq.s32.totalorder %s23, 1
      %p128 = por %p126, %p127
      %p130 = scmp.ne.s32.totalorder %s113, %s129
      %p131 = scmp.eq.s32.totalorder %s23, 0
      %p132 = por %p130, %p131
      %p133 = scmp.le.s32.totalorder 1, %s17
      %p134 = scmp.lt.s32.totalorder %s17, 3
      %p135 = pnand %p133, %p134
      %p136 = pneg %p135
      // Predicated region
      $region9: #{tpu_custom_call.1} parent=5 // pred_check
        _
      $region10: #{tpu_custom_call.1} parent=5 // pred_check_branch
        %138 = sbr.rel (%p135) target = $region12
      $region11: #{tpu_custom_call.1} parent=5 // pred_region
        %s139 = ssub.s32 %s17, 1
        // Predicated region
        $region13: #{tpu_custom_call.1} parent=11 // pred_check
          %p140 = pneg %p50
        $region14: #{tpu_custom_call.1} parent=11 // pred_check_branch
          %142 = sbr.rel (%p140) target = $region16
        $region15: #{tpu_custom_call.1} parent=11 // pred_region
          %s144 = ssub.s32 16, 16
          %145 = vsyncadd [#allocation9], %s144
          %148 = dma.hbm_to_smem %s0, 16, [#allocation6], [#allocation9]
        $region16: #{tpu_custom_call.1} parent=11 // pred_fallthru
          _
        // Predicated region
        $region17: #{tpu_custom_call.1} parent=11 // pred_check
          %p149 = pneg %p71
        $region18: #{tpu_custom_call.1} parent=11 // pred_check_branch
          %151 = sbr.rel (%p149) target = $region20
        $region19: #{tpu_custom_call.1} parent=11 // pred_region
          %s153 = ssub.s32 256, 256
          %154 = vsyncadd [#allocation7], %s153
          %s156 = sshll.u32 [#allocation10], 4
          %s157 = int_to_ptr.vmem [resolvable:$true] %s156
          %159 = dma.hbm_to_vmem [thread:$0]  %s1, 256, %s157, [#allocation7]
        $region20: #{tpu_custom_call.1} parent=11 // pred_fallthru
          _
      $region12: #{tpu_custom_call.1} parent=5 // pred_fallthru
        _
      %p160 = scmp.lt.s32.totalorder %s17, 2
      // Predicated region
      $region21: #{tpu_custom_call.1} parent=5 // pred_check
        %p161 = pneg %p160
      $region22: #{tpu_custom_call.1} parent=5 // pred_check_branch
        %163 = sbr.rel (%p161) target = $region24
      $region23: #{tpu_custom_call.1} parent=5 // pred_region
        // Predicated region
        $region25: #{tpu_custom_call.1} parent=23 // pred_check
          %p164 = pneg %p93
        $region26: #{tpu_custom_call.1} parent=23 // pred_check_branch
          %166 = sbr.rel (%p164) target = $region28
        $region27: #{tpu_custom_call.1} parent=23 // pred_region
          %s167 = sand.u32 %s83, 1
          %s168 = scalar_lea.sflag [#allocation12], %s167
          %s169 = sand.u32 %s83, 1
          %s170 = smul.addr %s169, 8
          %s171 = scalar_lea.vmem [#allocation11], %s170
          %s173 = ssub.s32 128, 128
          %174 = vsyncadd %s168, %s173
          %s175 = smul.addr %s25, 2
          %s176 = smul.addr %s24, 2
          %s177 = sadd.s32 %s175, %s176
          %s178 = smul.addr %s177, 64
          %s179 = scalar_lea.hbm %s2, %s178
          %s181 = sshll.u32 %s171, 4
          %s182 = int_to_ptr.vmem [resolvable:$true] %s181
          %184 = dma.hbm_to_vmem [thread:$0]  %s179, 128, %s182, %s168
        $region28: #{tpu_custom_call.1} parent=23 // pred_fallthru
          _
      $region24: #{tpu_custom_call.1} parent=5 // pred_fallthru
        _
      %p185 = scmp.le.s32.totalorder 1, %s17
      %p186 = scmp.lt.s32.totalorder %s17, 3
      %p187 = pnand %p185, %p186
      %p188 = pneg %p187
      // Predicated region
      $region29: #{tpu_custom_call.1} parent=5 // pred_check
        _
      $region30: #{tpu_custom_call.1} parent=5 // pred_check_branch
        %190 = sbr.rel (%p187) target = $region32
      $region31: #{tpu_custom_call.1} parent=5 // pred_region
        %s191 = ssub.s32 %s17, 1
        // Predicated region
        $region33: #{tpu_custom_call.1} parent=31 // pred_check
          %p192 = pneg %p50
        $region34: #{tpu_custom_call.1} parent=31 // pred_check_branch
          %194 = sbr.rel (%p192) target = $region36
        $region35: #{tpu_custom_call.1} parent=31 // pred_region
          %195 = dma.done [#allocation9], 16
        $region36: #{tpu_custom_call.1} parent=31 // pred_fallthru
          _
        // Predicated region
        $region37: #{tpu_custom_call.1} parent=31 // pred_check
          %p196 = pneg %p71
        $region38: #{tpu_custom_call.1} parent=31 // pred_check_branch
          %198 = sbr.rel (%p196) target = $region40
        $region39: #{tpu_custom_call.1} parent=31 // pred_region
          %199 = dma.done [#allocation7], 256
        $region40: #{tpu_custom_call.1} parent=31 // pred_fallthru
          _
        %s200 = sand.u32 %s86, 1
        %s201 = scalar_lea.sflag [#allocation12], %s200
        %s202 = sand.u32 %s86, 1
        %s203 = smul.addr %s202, 8
        %s204 = scalar_lea.vmem [#allocation11], %s203
        // Predicated region
        $region41: #{tpu_custom_call.1} parent=31 // pred_check
          %p205 = pneg %p99
        $region42: #{tpu_custom_call.1} parent=31 // pred_check_branch
          %207 = sbr.rel (%p205) target = $region44
        $region43: #{tpu_custom_call.1} parent=31 // pred_region
          %208 = dma.done %s201, 128
        $region44: #{tpu_custom_call.1} parent=31 // pred_fallthru
          _
        %209 = sfence
        %p210 = pneg %p50
        %p211 = pneg %p47
        %p212 = pneg %p71
        %p213 = pneg %p68
        %s214 = sand.u32 %s86, 1
        %s215 = scalar_lea.sflag [#allocation12], %s214
        %s216 = sand.u32 %s86, 1
        %s217 = smul.addr %s216, 8
        %s218 = scalar_lea.vmem [#allocation11], %s217
        %p219 = pneg %p99
        %p220 = pneg %p96
        %p221 = pneg %p125
        %p222 = pneg %p122
        %s223 = sand.u32 %s112, 1
        %s224 = scalar_lea.sflag [#allocation8], %s223
        %s225 = sand.u32 %s112, 1
        %s226 = smul.addr %s225, 2
        %s227 = scalar_lea.vmem [#allocation13], %s226
        %v228 = vld [vmem:[%s204] sm:$0xff]
        %v230 = vcombine.high %v228, %v228
        %vm232 = vcmask 1043456
        %v233 = vsel %vm232, %v228, 0.0
        %v234 = vrot.slane %v233, 4
        %v235 = vadd.f32 %v233, %v234
        %v236 = vrot.slane %v235, 2
        %v237 = vadd.f32 %v235, %v236
        %v238 = vrot.slane %v237, 1
        %v239 = vadd.f32 %v237, %v238
        %v240 = vsel %vm232, %v230, 0.0
        %v241 = vrot.slane %v240, 4
        %v242 = vadd.f32 %v240, %v241
        %v243 = vrot.slane %v242, 2
        %v244 = vadd.f32 %v242, %v243
        %v245 = vrot.slane %v244, 1
        %v246 = vadd.f32 %v244, %v245
        %v247 = vsel %vm232, %v228, -inf
        %v248 = vrot.slane %v247, 4
        %v249 = vmax.f32 %v247, %v248
        %v250 = vrot.slane %v249, 2
        %v251 = vmax.f32 %v249, %v250
        %v252 = vrot.slane %v251, 1
        %v253 = vmax.f32 %v251, %v252
        %v254 = vsel %vm232, %v230, -inf
        %v255 = vrot.slane %v254, 4
        %v256 = vmax.f32 %v254, %v255
        %v257 = vrot.slane %v256, 2
        %v258 = vmax.f32 %v256, %v257
        %v259 = vrot.slane %v258, 1
        %v260 = vmax.f32 %v258, %v259
        %p261 = scmp.eq.s32.totalorder %s27, 0
        // Predicated region
        $region45: #{tpu_custom_call.1} parent=31 // pred_check
          %p262 = pneg %p261
        $region46: #{tpu_custom_call.1} parent=31 // pred_check_branch
          %264 = sbr.rel (%p262) target = $region48
        $region47: #{tpu_custom_call.1} parent=31 // pred_region
          %v267 = vcombine.low %v239, %v246
          %v269 = vunpack.c.l.s4 1966171168
          %v270 = vunpack.c.0.s8 %v269
          %v271 = vlaneseq
          %v272 = vshrl.u32 %v271, 7
          %v273 = vsub.s32 %v270, %v272
          %v274 = vrot.slane %v267, %v273
          %v276 = vunpack.c.l.s4 1966171168
          %v277 = vunpack.c.0.s8 %v276
          %v278 = vlaneseq
          %v279 = vshrl.u32 %v278, 7
          %v280 = vsub.s32 %v277, %v279
          %v281 = vrot.slane %v274, %v280
          %v283 = vlaneseq
          %vm284 = vcmp.ge.s32.totalorder %v283, 0
          %vm285 = vcmp.lt.s32.totalorder %v283, 256
          %vm286 = vmand %vm284, %vm285
          %287 = vst.msk [vmem:[#allocation2] sm:$0x3] %vm286, %v281
          %v290 = vcombine.low %v253, %v260
          %v292 = vunpack.c.l.s4 1966171168
          %v293 = vunpack.c.0.s8 %v292
          %v294 = vlaneseq
          %v295 = vshrl.u32 %v294, 7
          %v296 = vsub.s32 %v293, %v295
          %v297 = vrot.slane %v290, %v296
          %v299 = vunpack.c.l.s4 1966171168
          %v300 = vunpack.c.0.s8 %v299
          %v301 = vlaneseq
          %v302 = vshrl.u32 %v301, 7
          %v303 = vsub.s32 %v300, %v302
          %v304 = vrot.slane %v297, %v303
          %306 = vst.msk [vmem:[#allocation3] sm:$0x3] %vm286, %v304
        $region48: #{tpu_custom_call.1} parent=31 // pred_fallthru
          _
        %p307 = scmp.gt.s32.totalorder %s27, 0
        // Predicated region
        $region49: #{tpu_custom_call.1} parent=31 // pred_check
          %p308 = pneg %p307
        $region50: #{tpu_custom_call.1} parent=31 // pred_check_branch
          %310 = sbr.rel (%p308) target = $region52
        $region51: #{tpu_custom_call.1} parent=31 // pred_region
          %v311 = vld [vmem:[#allocation2] sm:$0x3]
          %v314 = vcombine.low %v239, %v246
          %v316 = vunpack.c.l.s4 1966171168
          %v317 = vunpack.c.0.s8 %v316
          %v318 = vlaneseq
          %v319 = vshrl.u32 %v318, 7
          %v320 = vsub.s32 %v317, %v319
          %v321 = vrot.slane %v314, %v320
          %v323 = vunpack.c.l.s4 1966171168
          %v324 = vunpack.c.0.s8 %v323
          %v325 = vlaneseq
          %v326 = vshrl.u32 %v325, 7
          %v327 = vsub.s32 %v324, %v326
          %v328 = vrot.slane %v321, %v327
          %v330 = vadd.f32 %v311, %v328
          %v331 = vlaneseq
          %vm332 = vcmp.ge.s32.totalorder %v331, 0
          %vm333 = vcmp.lt.s32.totalorder %v331, 256
          %vm334 = vmand %vm332, %vm333
          %335 = vst.msk [vmem:[#allocation2] sm:$0x3] %vm334, %v330
          %v336 = vld [vmem:[#allocation3] sm:$0x3]
          %v339 = vcombine.low %v253, %v260
          %v341 = vunpack.c.l.s4 1966171168
          %v342 = vunpack.c.0.s8 %v341
          %v343 = vlaneseq
          %v344 = vshrl.u32 %v343, 7
          %v345 = vsub.s32 %v342, %v344
          %v346 = vrot.slane %v339, %v345
          %v348 = vunpack.c.l.s4 1966171168
          %v349 = vunpack.c.0.s8 %v348
          %v350 = vlaneseq
          %v351 = vshrl.u32 %v350, 7
          %v352 = vsub.s32 %v349, %v351
          %v353 = vrot.slane %v346, %v352
          %v355 = vmax.f32 %v336, %v353
          %356 = vst.msk [vmem:[#allocation3] sm:$0x3] %vm334, %v355
        $region52: #{tpu_custom_call.1} parent=31 // pred_fallthru
          _
        // Predicated region
        $region53: #{tpu_custom_call.1} parent=31 // pred_check
          %p357 = pneg %p261
        $region54: #{tpu_custom_call.1} parent=31 // pred_check_branch
          %359 = sbr.rel (%p357) target = $region56
        $region55: #{tpu_custom_call.1} parent=31 // pred_region
          %v360 = vlaneseq
          %vm361 = vcmp.ge.s32.totalorder %v360, 0
          %vm362 = vcmp.lt.s32.totalorder %v360, 512
          %vm363 = vmand %vm361, %vm362
          %364 = vst.msk [vmem:[#allocation4] sm:$0xf] %vm363, 0.0
          %365 = vst.msk [vmem:[#allocation5] sm:$0xf] %vm363, 0.0
          %v366 = vld [vmem:[#allocation2] sm:$0x3]
          %vm367 = vcmp.lt.s32.totalorder %v360, 256
          %vm368 = vmand %vm361, %vm367
          %369 = vst.msk [vmem:[#allocation4 + $0x1] sm:$0x3] %vm368, %v366
          %v370 = vld [vmem:[#allocation3] sm:$0x3]
          %371 = vst.msk [vmem:[#allocation5 + $0x1] sm:$0x3] %vm368, %v370
          %s372 = sld [smem:[#allocation6]]
          %v373 = vld [vmem:[#allocation4] sm:$0x7]
          %v374 = vstv %s372
          %v375 = vmul.f32 %v374, %v373
          %s376 = sld [smem:[#allocation6 + $0x31]]
          %v377 = vld [vmem:[#allocation5] sm:$0x7]
          %v378 = vstv %s376
          %v379 = vmul.f32 %v378, %v377
          %s380 = sld [smem:[#allocation6 + $0x7]]
          %v381 = vstv %s380
          %v382 = vmul.f32 %v381, %v373
          %384 = vrot.lane.b32.xlu0 %v382, 112
          %v385 = vpop.permute.xlu0 %384
          %v386 = vrot.slane %v385, 1
          %vm387 = vcmask 916480
          %v388 = vsel %vm387, %v385, %v386
          %v390 = vadd.f32 %v375, %v388
          %s391 = sld [smem:[#allocation6 + $0x38]]
          %v392 = vstv %s391
          %v393 = vmul.f32 %v392, %v377
          %395 = vrot.lane.b32.xlu0 %v393, 112
          %v396 = vpop.permute.xlu0 %395
          %v397 = vrot.slane %v396, 1
          %v398 = vsel %vm387, %v396, %v397
          %v400 = vadd.f32 %v379, %v398
          %s401 = sld [smem:[#allocation6 + $0xe]]
          %v402 = vstv %s401
          %v403 = vmul.f32 %v402, %v373
          %405 = vrot.lane.b32.xlu0 %v403, 96
          %v406 = vpop.permute.xlu0 %405
          %v407 = vrot.slane %v406, 1
          %vm408 = vcmask 785408
          %v409 = vsel %vm408, %v406, %v407
          %v411 = vadd.f32 %v390, %v409
          %s412 = sld [smem:[#allocation6 + $0x3f]]
          %v413 = vstv %s412
          %v414 = vmul.f32 %v413, %v377
          %416 = vrot.lane.b32.xlu0 %v414, 96
          %v417 = vpop.permute.xlu0 %416
          %v418 = vrot.slane %v417, 1
          %v419 = vsel %vm408, %v417, %v418
          %v421 = vadd.f32 %v400, %v419
          %s422 = sld [smem:[#allocation6 + $0x15]]
          %v423 = vstv %s422
          %v424 = vmul.f32 %v423, %v373
          %426 = vrot.lane.b32.xlu0 %v424, 80
          %v427 = vpop.permute.xlu0 %426
          %v428 = vrot.slane %v427, 1
          %vm429 = vcmask 654336
          %v430 = vsel %vm429, %v427, %v428
          %v432 = vadd.f32 %v411, %v430
          %s433 = sld [smem:[#allocation6 + $0x46]]
          %v434 = vstv %s433
          %v435 = vmul.f32 %v434, %v377
          %437 = vrot.lane.b32.xlu0 %v435, 80
          %v438 = vpop.permute.xlu0 %437
          %v439 = vrot.slane %v438, 1
          %v440 = vsel %vm429, %v438, %v439
          %v442 = vadd.f32 %v421, %v440
          %s443 = sld [smem:[#allocation6 + $0x1c]]
          %v444 = vld [vmem:[#allocation4 + $0x1] sm:$0x7]
          %v445 = vstv %s443
          %v446 = vmul.f32 %v445, %v444
          %448 = vrot.lane.b32.xlu0 %v446, 64
          %v449 = vpop.permute.xlu0 %448
          %v450 = vrot.slane %v449, 7
          %vm451 = vcmask 523264
          %v452 = vsel %vm451, %v450, %v449
          %v454 = vadd.f32 %v432, %v452
          %s455 = sld [smem:[#allocation6 + $0x4d]]
          %v456 = vld [vmem:[#allocation5 + $0x1] sm:$0x7]
          %v457 = vstv %s455
          %v458 = vmul.f32 %v457, %v456
          %460 = vrot.lane.b32.xlu0 %v458, 64
          %v461 = vpop.permute.xlu0 %460
          %v462 = vrot.slane %v461, 7
          %v463 = vsel %vm451, %v462, %v461
          %v465 = vadd.f32 %v442, %v463
          %s466 = sld [smem:[#allocation6 + $0x23]]
          %v467 = vstv %s466
          %v468 = vmul.f32 %v467, %v444
          %470 = vrot.lane.b32.xlu0 %v468, 48
          %v471 = vpop.permute.xlu0 %470
          %v472 = vrot.slane %v471, 7
          %vm473 = vcmask 392192
          %v474 = vsel %vm473, %v472, %v471
          %v476 = vadd.f32 %v454, %v474
          %s477 = sld [smem:[#allocation6 + $0x54]]
          %v478 = vstv %s477
          %v479 = vmul.f32 %v478, %v456
          %481 = vrot.lane.b32.xlu0 %v479, 48
          %v482 = vpop.permute.xlu0 %481
          %v483 = vrot.slane %v482, 7
          %v484 = vsel %vm473, %v483, %v482
          %v486 = vadd.f32 %v465, %v484
          %s487 = sld [smem:[#allocation6 + $0x2a]]
          %v488 = vstv %s487
          %v489 = vmul.f32 %v488, %v444
          %491 = vrot.lane.b32.xlu0 %v489, 32
          %v492 = vpop.permute.xlu0 %491
          %v493 = vrot.slane %v492, 7
          %vm494 = vcmask 261120
          %v495 = vsel %vm494, %v493, %v492
          %v497 = vadd.f32 %v476, %v495
          %s498 = sld [smem:[#allocation6 + $0x5b]]
          %v499 = vstv %s498
          %v500 = vmul.f32 %v499, %v456
          %502 = vrot.lane.b32.xlu0 %v500, 32
          %v503 = vpop.permute.xlu0 %502
          %v504 = vrot.slane %v503, 7
          %v505 = vsel %vm494, %v504, %v503
          %v507 = vadd.f32 %v486, %v505
          %v508 = vadd.f32 %v497, %v507
          %v509 = vld [vmem:[#allocation10] ss:$8 sm:$0x3]
          %511 = vrot.lane.b32.xlu0 %v509, 77
          %v512 = vpop.permute.xlu0 %511
          %v513 = vrot.slane %v512, 7
          %vm514 = vcmask 629760
          %v515 = vsel %vm514, %v513, %v512
          %v517 = vmul.f32 %v508, %v515
          %s518 = sld [smem:[#allocation6 + $0x1]]
          %v519 = vstv %s518
          %v520 = vmul.f32 %v519, %v373
          %s521 = sld [smem:[#allocation6 + $0x32]]
          %v522 = vstv %s521
          %v523 = vmul.f32 %v522, %v377
          %s524 = sld [smem:[#allocation6 + $0x8]]
          %v525 = vstv %s524
          %v526 = vmul.f32 %v525, %v373
          %528 = vrot.lane.b32.xlu0 %v526, 112
          %v529 = vpop.permute.xlu0 %528
          %v530 = vrot.slane %v529, 1
          %v531 = vsel %vm387, %v529, %v530
          %v533 = vadd.f32 %v520, %v531
          %s534 = sld [smem:[#allocation6 + $0x39]]
          %v535 = vstv %s534
          %v536 = vmul.f32 %v535, %v377
          %538 = vrot.lane.b32.xlu0 %v536, 112
          %v539 = vpop.permute.xlu0 %538
          %v540 = vrot.slane %v539, 1
          %v541 = vsel %vm387, %v539, %v540
          %v543 = vadd.f32 %v523, %v541
          %s544 = sld [smem:[#allocation6 + $0xf]]
          %v545 = vstv %s544
          %v546 = vmul.f32 %v545, %v373
          %548 = vrot.lane.b32.xlu0 %v546, 96
          %v549 = vpop.permute.xlu0 %548
          %v550 = vrot.slane %v549, 1
          %v551 = vsel %vm408, %v549, %v550
          %v553 = vadd.f32 %v533, %v551
          %s554 = sld [smem:[#allocation6 + $0x40]]
          %v555 = vstv %s554
          %v556 = vmul.f32 %v555, %v377
          %558 = vrot.lane.b32.xlu0 %v556, 96
          %v559 = vpop.permute.xlu0 %558
          %v560 = vrot.slane %v559, 1
          %v561 = vsel %vm408, %v559, %v560
          %v563 = vadd.f32 %v543, %v561
          %s564 = sld [smem:[#allocation6 + $0x16]]
          %v565 = vstv %s564
          %v566 = vmul.f32 %v565, %v373
          %568 = vrot.lane.b32.xlu0 %v566, 80
          %v569 = vpop.permute.xlu0 %568
          %v570 = vrot.slane %v569, 1
          %v571 = vsel %vm429, %v569, %v570
          %v573 = vadd.f32 %v553, %v571
          %s574 = sld [smem:[#allocation6 + $0x47]]
          %v575 = vstv %s574
          %v576 = vmul.f32 %v575, %v377
          %578 = vrot.lane.b32.xlu0 %v576, 80
          %v579 = vpop.permute.xlu0 %578
          %v580 = vrot.slane %v579, 1
          %v581 = vsel %vm429, %v579, %v580
          %v583 = vadd.f32 %v563, %v581
          %s584 = sld [smem:[#allocation6 + $0x1d]]
          %v585 = vstv %s584
          %v586 = vmul.f32 %v585, %v444
          %588 = vrot.lane.b32.xlu0 %v586, 64
          %v589 = vpop.permute.xlu0 %588
          %v590 = vrot.slane %v589, 7
          %v591 = vsel %vm451, %v590, %v589
          %v593 = vadd.f32 %v573, %v591
          %s594 = sld [smem:[#allocation6 + $0x4e]]
          %v595 = vstv %s594
          %v596 = vmul.f32 %v595, %v456
          %598 = vrot.lane.b32.xlu0 %v596, 64
          %v599 = vpop.permute.xlu0 %598
          %v600 = vrot.slane %v599, 7
          %v601 = vsel %vm451, %v600, %v599
          %v603 = vadd.f32 %v583, %v601
          %s604 = sld [smem:[#allocation6 + $0x24]]
          %v605 = vstv %s604
          %v606 = vmul.f32 %v605, %v444
          %608 = vrot.lane.b32.xlu0 %v606, 48
          %v609 = vpop.permute.xlu0 %608
          %v610 = vrot.slane %v609, 7
          %v611 = vsel %vm473, %v610, %v609
          %v613 = vadd.f32 %v593, %v611
          %s614 = sld [smem:[#allocation6 + $0x55]]
          %v615 = vstv %s614
          %v616 = vmul.f32 %v615, %v456
          %618 = vrot.lane.b32.xlu0 %v616, 48
          %v619 = vpop.permute.xlu0 %618
          %v620 = vrot.slane %v619, 7
          %v621 = vsel %vm473, %v620, %v619
          %v623 = vadd.f32 %v603, %v621
          %s624 = sld [smem:[#allocation6 + $0x2b]]
          %v625 = vstv %s624
          %v626 = vmul.f32 %v625, %v444
          %628 = vrot.lane.b32.xlu0 %v626, 32
          %v629 = vpop.permute.xlu0 %628
          %v630 = vrot.slane %v629, 7
          %v631 = vsel %vm494, %v630, %v629
          %v633 = vadd.f32 %v613, %v631
          %s634 = sld [smem:[#allocation6 + $0x5c]]
          %v635 = vstv %s634
          %v636 = vmul.f32 %v635, %v456
          %638 = vrot.lane.b32.xlu0 %v636, 32
          %v639 = vpop.permute.xlu0 %638
          %v640 = vrot.slane %v639, 7
          %v641 = vsel %vm494, %v640, %v639
          %v643 = vadd.f32 %v623, %v641
          %v644 = vadd.f32 %v633, %v643
          %s645 = scalar_lea.vmem [#allocation10], 1
          %v646 = vld [vmem:[%s645] ss:$8 sm:$0x3]
          %648 = vrot.lane.b32.xlu0 %v646, 78
          %v649 = vpop.permute.xlu0 %648
          %v650 = vrot.slane %v649, 7
          %vm651 = vcmask 637952
          %v652 = vsel %vm651, %v650, %v649
          %v654 = vmul.f32 %v644, %v652
          %s655 = sld [smem:[#allocation6 + $0x2]]
          %v656 = vstv %s655
          %v657 = vmul.f32 %v656, %v373
          %s658 = sld [smem:[#allocation6 + $0x33]]
          %v659 = vstv %s658
          %v660 = vmul.f32 %v659, %v377
          %s661 = sld [smem:[#allocation6 + $0x9]]
          %v662 = vstv %s661
          %v663 = vmul.f32 %v662, %v373
          %665 = vrot.lane.b32.xlu0 %v663, 112
          %v666 = vpop.permute.xlu0 %665
          %v667 = vrot.slane %v666, 1
          %v668 = vsel %vm387, %v666, %v667
          %v670 = vadd.f32 %v657, %v668
          %s671 = sld [smem:[#allocation6 + $0x3a]]
          %v672 = vstv %s671
          %v673 = vmul.f32 %v672, %v377
          %675 = vrot.lane.b32.xlu0 %v673, 112
          %v676 = vpop.permute.xlu0 %675
          %v677 = vrot.slane %v676, 1
          %v678 = vsel %vm387, %v676, %v677
          %v680 = vadd.f32 %v660, %v678
          %s681 = sld [smem:[#allocation6 + $0x10]]
          %v682 = vstv %s681
          %v683 = vmul.f32 %v682, %v373
          %685 = vrot.lane.b32.xlu0 %v683, 96
          %v686 = vpop.permute.xlu0 %685
          %v687 = vrot.slane %v686, 1
          %v688 = vsel %vm408, %v686, %v687
          %v690 = vadd.f32 %v670, %v688
          %s691 = sld [smem:[#allocation6 + $0x41]]
          %v692 = vstv %s691
          %v693 = vmul.f32 %v692, %v377
          %695 = vrot.lane.b32.xlu0 %v693, 96
          %v696 = vpop.permute.xlu0 %695
          %v697 = vrot.slane %v696, 1
          %v698 = vsel %vm408, %v696, %v697
          %v700 = vadd.f32 %v680, %v698
          %s701 = sld [smem:[#allocation6 + $0x17]]
          %v702 = vstv %s701
          %v703 = vmul.f32 %v702, %v373
          %705 = vrot.lane.b32.xlu0 %v703, 80
          %v706 = vpop.permute.xlu0 %705
          %v707 = vrot.slane %v706, 1
          %v708 = vsel %vm429, %v706, %v707
          %v710 = vadd.f32 %v690, %v708
          %s711 = sld [smem:[#allocation6 + $0x48]]
          %v712 = vstv %s711
          %v713 = vmul.f32 %v712, %v377
          %715 = vrot.lane.b32.xlu0 %v713, 80
          %v716 = vpop.permute.xlu0 %715
          %v717 = vrot.slane %v716, 1
          %v718 = vsel %vm429, %v716, %v717
          %v720 = vadd.f32 %v700, %v718
          %s721 = sld [smem:[#allocation6 + $0x1e]]
          %v722 = vstv %s721
          %v723 = vmul.f32 %v722, %v444
          %725 = vrot.lane.b32.xlu0 %v723, 64
          %v726 = vpop.permute.xlu0 %725
          %v727 = vrot.slane %v726, 7
          %v728 = vsel %vm451, %v727, %v726
          %v730 = vadd.f32 %v710, %v728
          %s731 = sld [smem:[#allocation6 + $0x4f]]
          %v732 = vstv %s731
          %v733 = vmul.f32 %v732, %v456
          %735 = vrot.lane.b32.xlu0 %v733, 64
          %v736 = vpop.permute.xlu0 %735
          %v737 = vrot.slane %v736, 7
          %v738 = vsel %vm451, %v737, %v736
          %v740 = vadd.f32 %v720, %v738
          %s741 = sld [smem:[#allocation6 + $0x25]]
          %v742 = vstv %s741
          %v743 = vmul.f32 %v742, %v444
          %745 = vrot.lane.b32.xlu0 %v743, 48
          %v746 = vpop.permute.xlu0 %745
          %v747 = vrot.slane %v746, 7
          %v748 = vsel %vm473, %v747, %v746
          %v750 = vadd.f32 %v730, %v748
          %s751 = sld [smem:[#allocation6 + $0x56]]
          %v752 = vstv %s751
          %v753 = vmul.f32 %v752, %v456
          %755 = vrot.lane.b32.xlu0 %v753, 48
          %v756 = vpop.permute.xlu0 %755
          %v757 = vrot.slane %v756, 7
          %v758 = vsel %vm473, %v757, %v756
          %v760 = vadd.f32 %v740, %v758
          %s761 = sld [smem:[#allocation6 + $0x2c]]
          %v762 = vstv %s761
          %v763 = vmul.f32 %v762, %v444
          %765 = vrot.lane.b32.xlu0 %v763, 32
          %v766 = vpop.permute.xlu0 %765
          %v767 = vrot.slane %v766, 7
          %v768 = vsel %vm494, %v767, %v766
          %v770 = vadd.f32 %v750, %v768
          %s771 = sld [smem:[#allocation6 + $0x5d]]
          %v772 = vstv %s771
          %v773 = vmul.f32 %v772, %v456
          %775 = vrot.lane.b32.xlu0 %v773, 32
          %v776 = vpop.permute.xlu0 %775
          %v777 = vrot.slane %v776, 7
          %v778 = vsel %vm494, %v777, %v776
          %v780 = vadd.f32 %v760, %v778
          %v781 = vadd.f32 %v770, %v780
          %s782 = scalar_lea.vmem [#allocation10], 2
          %v783 = vld [vmem:[%s782] ss:$8 sm:$0x3]
          %785 = vrot.lane.b32.xlu0 %v783, 79
          %v786 = vpop.permute.xlu0 %785
          %v787 = vrot.slane %v786, 7
          %vm788 = vcmask 646144
          %v789 = vsel %vm788, %v787, %v786
          %v791 = vmul.f32 %v781, %v789
          %s792 = sld [smem:[#allocation6 + $0x3]]
          %v793 = vstv %s792
          %v794 = vmul.f32 %v793, %v373
          %s795 = sld [smem:[#allocation6 + $0x34]]
          %v796 = vstv %s795
          %v797 = vmul.f32 %v796, %v377
          %s798 = sld [smem:[#allocation6 + $0xa]]
          %v799 = vstv %s798
          %v800 = vmul.f32 %v799, %v373
          %802 = vrot.lane.b32.xlu0 %v800, 112
          %v803 = vpop.permute.xlu0 %802
          %v804 = vrot.slane %v803, 1
          %v805 = vsel %vm387, %v803, %v804
          %v807 = vadd.f32 %v794, %v805
          %s808 = sld [smem:[#allocation6 + $0x3b]]
          %v809 = vstv %s808
          %v810 = vmul.f32 %v809, %v377
          %812 = vrot.lane.b32.xlu0 %v810, 112
          %v813 = vpop.permute.xlu0 %812
          %v814 = vrot.slane %v813, 1
          %v815 = vsel %vm387, %v813, %v814
          %v817 = vadd.f32 %v797, %v815
          %s818 = sld [smem:[#allocation6 + $0x11]]
          %v819 = vstv %s818
          %v820 = vmul.f32 %v819, %v373
          %822 = vrot.lane.b32.xlu0 %v820, 96
          %v823 = vpop.permute.xlu0 %822
          %v824 = vrot.slane %v823, 1
          %v825 = vsel %vm408, %v823, %v824
          %v827 = vadd.f32 %v807, %v825
          %s828 = sld [smem:[#allocation6 + $0x42]]
          %v829 = vstv %s828
          %v830 = vmul.f32 %v829, %v377
          %832 = vrot.lane.b32.xlu0 %v830, 96
          %v833 = vpop.permute.xlu0 %832
          %v834 = vrot.slane %v833, 1
          %v835 = vsel %vm408, %v833, %v834
          %v837 = vadd.f32 %v817, %v835
          %s838 = sld [smem:[#allocation6 + $0x18]]
          %v839 = vld [vmem:[#allocation4 + $0x1] sm:$0x3]
          %v840 = vstv %s838
          %v841 = vmul.f32 %v840, %v839
          %843 = vrot.lane.b32.xlu0 %v841, 80
          %v844 = vpop.permute.xlu0 %843
          %v845 = vrot.slane %v844, 7
          %v846 = vsel %vm429, %v845, %v844
          %v848 = vadd.f32 %v827, %v846
          %s849 = sld [smem:[#allocation6 + $0x49]]
          %v850 = vld [vmem:[#allocation5 + $0x1] sm:$0x3]
          %v851 = vstv %s849
          %v852 = vmul.f32 %v851, %v850
          %854 = vrot.lane.b32.xlu0 %v852, 80
          %v855 = vpop.permute.xlu0 %854
          %v856 = vrot.slane %v855, 7
          %v857 = vsel %vm429, %v856, %v855
          %v859 = vadd.f32 %v837, %v857
          %s860 = sld [smem:[#allocation6 + $0x1f]]
          %v861 = vstv %s860
          %v862 = vmul.f32 %v861, %v444
          %864 = vrot.lane.b32.xlu0 %v862, 64
          %v865 = vpop.permute.xlu0 %864
          %v866 = vrot.slane %v865, 7
          %v867 = vsel %vm451, %v866, %v865
          %v869 = vadd.f32 %v848, %v867
          %s870 = sld [smem:[#allocation6 + $0x50]]
          %v871 = vstv %s870
          %v872 = vmul.f32 %v871, %v456
          %874 = vrot.lane.b32.xlu0 %v872, 64
          %v875 = vpop.permute.xlu0 %874
          %v876 = vrot.slane %v875, 7
          %v877 = vsel %vm451, %v876, %v875
          %v879 = vadd.f32 %v859, %v877
          %s880 = sld [smem:[#allocation6 + $0x26]]
          %v881 = vstv %s880
          %v882 = vmul.f32 %v881, %v444
          %884 = vrot.lane.b32.xlu0 %v882, 48
          %v885 = vpop.permute.xlu0 %884
          %v886 = vrot.slane %v885, 7
          %v887 = vsel %vm473, %v886, %v885
          %v889 = vadd.f32 %v869, %v887
          %s890 = sld [smem:[#allocation6 + $0x57]]
          %v891 = vstv %s890
          %v892 = vmul.f32 %v891, %v456
          %894 = vrot.lane.b32.xlu0 %v892, 48
          %v895 = vpop.permute.xlu0 %894
          %v896 = vrot.slane %v895, 7
          %v897 = vsel %vm473, %v896, %v895
          %v899 = vadd.f32 %v879, %v897
          %s900 = sld [smem:[#allocation6 + $0x2d]]
          %v901 = vstv %s900
          %v902 = vmul.f32 %v901, %v444
          %904 = vrot.lane.b32.xlu0 %v902, 32
          %v905 = vpop.permute.xlu0 %904
          %v906 = vrot.slane %v905, 7
          %v907 = vsel %vm494, %v906, %v905
          %v909 = vadd.f32 %v889, %v907
          %s910 = sld [smem:[#allocation6 + $0x5e]]
          %v911 = vstv %s910
          %v912 = vmul.f32 %v911, %v456
          %914 = vrot.lane.b32.xlu0 %v912, 32
          %v915 = vpop.permute.xlu0 %914
          %v916 = vrot.slane %v915, 7
          %v917 = vsel %vm494, %v916, %v915
          %v919 = vadd.f32 %v899, %v917
          %v920 = vadd.f32 %v909, %v919
          %s921 = sld [smem:[#allocation6 + $0x4]]
          %v922 = vstv %s921
          %v923 = vmul.f32 %v922, %v373
          %s924 = sld [smem:[#allocation6 + $0x35]]
          %v925 = vstv %s924
          %v926 = vmul.f32 %v925, %v377
          %s927 = sld [smem:[#allocation6 + $0xb]]
          %v928 = vstv %s927
          %v929 = vmul.f32 %v928, %v373
          %931 = vrot.lane.b32.xlu0 %v929, 112
          %v932 = vpop.permute.xlu0 %931
          %v933 = vrot.slane %v932, 1
          %v934 = vsel %vm387, %v932, %v933
          %v936 = vadd.f32 %v923, %v934
          %s937 = sld [smem:[#allocation6 + $0x3c]]
          %v938 = vstv %s937
          %v939 = vmul.f32 %v938, %v377
          %941 = vrot.lane.b32.xlu0 %v939, 112
          %v942 = vpop.permute.xlu0 %941
          %v943 = vrot.slane %v942, 1
          %v944 = vsel %vm387, %v942, %v943
          %v946 = vadd.f32 %v926, %v944
          %s947 = sld [smem:[#allocation6 + $0x12]]
          %v948 = vstv %s947
          %v949 = vmul.f32 %v948, %v373
          %951 = vrot.lane.b32.xlu0 %v949, 96
          %v952 = vpop.permute.xlu0 %951
          %v953 = vrot.slane %v952, 1
          %v954 = vsel %vm408, %v952, %v953
          %v956 = vadd.f32 %v936, %v954
          %s957 = sld [smem:[#allocation6 + $0x43]]
          %v958 = vstv %s957
          %v959 = vmul.f32 %v958, %v377
          %961 = vrot.lane.b32.xlu0 %v959, 96
          %v962 = vpop.permute.xlu0 %961
          %v963 = vrot.slane %v962, 1
          %v964 = vsel %vm408, %v962, %v963
          %v966 = vadd.f32 %v946, %v964
          %s967 = sld [smem:[#allocation6 + $0x19]]
          %v968 = vstv %s967
          %v969 = vmul.f32 %v968, %v444
          %971 = vrot.lane.b32.xlu0 %v969, 80
          %v972 = vpop.permute.xlu0 %971
          %v973 = vrot.slane %v972, 7
          %v974 = vsel %vm429, %v973, %v972
          %v976 = vadd.f32 %v956, %v974
          %s977 = sld [smem:[#allocation6 + $0x4a]]
          %v978 = vstv %s977
          %v979 = vmul.f32 %v978, %v456
          %981 = vrot.lane.b32.xlu0 %v979, 80
          %v982 = vpop.permute.xlu0 %981
          %v983 = vrot.slane %v982, 7
          %v984 = vsel %vm429, %v983, %v982
          %v986 = vadd.f32 %v966, %v984
          %s987 = sld [smem:[#allocation6 + $0x20]]
          %v988 = vstv %s987
          %v989 = vmul.f32 %v988, %v444
          %991 = vrot.lane.b32.xlu0 %v989, 64
          %v992 = vpop.permute.xlu0 %991
          %v993 = vrot.slane %v992, 7
          %v994 = vsel %vm451, %v993, %v992
          %v996 = vadd.f32 %v976, %v994
          %s997 = sld [smem:[#allocation6 + $0x51]]
          %v998 = vstv %s997
          %v999 = vmul.f32 %v998, %v456
          %1001 = vrot.lane.b32.xlu0 %v999, 64
          %v1002 = vpop.permute.xlu0 %1001
          %v1003 = vrot.slane %v1002, 7
          %v1004 = vsel %vm451, %v1003, %v1002
          %v1006 = vadd.f32 %v986, %v1004
          %s1007 = sld [smem:[#allocation6 + $0x27]]
          %v1008 = vstv %s1007
          %v1009 = vmul.f32 %v1008, %v444
          %1011 = vrot.lane.b32.xlu0 %v1009, 48
          %v1012 = vpop.permute.xlu0 %1011
          %v1013 = vrot.slane %v1012, 7
          %v1014 = vsel %vm473, %v1013, %v1012
          %v1016 = vadd.f32 %v996, %v1014
          %s1017 = sld [smem:[#allocation6 + $0x58]]
          %v1018 = vstv %s1017
          %v1019 = vmul.f32 %v1018, %v456
          %1021 = vrot.lane.b32.xlu0 %v1019, 48
          %v1022 = vpop.permute.xlu0 %1021
          %v1023 = vrot.slane %v1022, 7
          %v1024 = vsel %vm473, %v1023, %v1022
          %v1026 = vadd.f32 %v1006, %v1024
          %s1027 = sld [smem:[#allocation6 + $0x2e]]
          %v1028 = vstv %s1027
          %v1029 = vmul.f32 %v1028, %v444
          %1031 = vrot.lane.b32.xlu0 %v1029, 32
          %v1032 = vpop.permute.xlu0 %1031
          %v1033 = vrot.slane %v1032, 7
          %v1034 = vsel %vm494, %v1033, %v1032
          %v1036 = vadd.f32 %v1016, %v1034
          %s1037 = sld [smem:[#allocation6 + $0x5f]]
          %v1038 = vstv %s1037
          %v1039 = vmul.f32 %v1038, %v456
          %1041 = vrot.lane.b32.xlu0 %v1039, 32
          %v1042 = vpop.permute.xlu0 %1041
          %v1043 = vrot.slane %v1042, 7
          %v1044 = vsel %vm494, %v1043, %v1042
          %v1046 = vadd.f32 %v1026, %v1044
          %v1047 = vadd.f32 %v1036, %v1046
          %s1048 = scalar_lea.vmem [#allocation10], 4
          %v1049 = vld [vmem:[%s1048] ss:$8 sm:$0x3]
          %1051 = vrot.lane.b32.xlu0 %v1049, 81
          %v1052 = vpop.permute.xlu0 %1051
          %v1053 = vrot.slane %v1052, 7
          %vm1054 = vcmask 662528
          %v1055 = vsel %vm1054, %v1053, %v1052
          %v1057 = vmul.f32 %v1047, %v1055
          %s1058 = sld [smem:[#allocation6 + $0x5]]
          %v1059 = vstv %s1058
          %v1060 = vmul.f32 %v1059, %v373
          %s1061 = sld [smem:[#allocation6 + $0x36]]
          %v1062 = vstv %s1061
          %v1063 = vmul.f32 %v1062, %v377
          %s1064 = sld [smem:[#allocation6 + $0xc]]
          %v1065 = vstv %s1064
          %v1066 = vmul.f32 %v1065, %v373
          %1068 = vrot.lane.b32.xlu0 %v1066, 112
          %v1069 = vpop.permute.xlu0 %1068
          %v1070 = vrot.slane %v1069, 1
          %v1071 = vsel %vm387, %v1069, %v1070
          %v1073 = vadd.f32 %v1060, %v1071
          %s1074 = sld [smem:[#allocation6 + $0x3d]]
          %v1075 = vstv %s1074
          %v1076 = vmul.f32 %v1075, %v377
          %1078 = vrot.lane.b32.xlu0 %v1076, 112
          %v1079 = vpop.permute.xlu0 %1078
          %v1080 = vrot.slane %v1079, 1
          %v1081 = vsel %vm387, %v1079, %v1080
          %v1083 = vadd.f32 %v1063, %v1081
          %s1084 = sld [smem:[#allocation6 + $0x13]]
          %v1085 = vstv %s1084
          %v1086 = vmul.f32 %v1085, %v373
          %1088 = vrot.lane.b32.xlu0 %v1086, 96
          %v1089 = vpop.permute.xlu0 %1088
          %v1090 = vrot.slane %v1089, 1
          %v1091 = vsel %vm408, %v1089, %v1090
          %v1093 = vadd.f32 %v1073, %v1091
          %s1094 = sld [smem:[#allocation6 + $0x44]]
          %v1095 = vstv %s1094
          %v1096 = vmul.f32 %v1095, %v377
          %1098 = vrot.lane.b32.xlu0 %v1096, 96
          %v1099 = vpop.permute.xlu0 %1098
          %v1100 = vrot.slane %v1099, 1
          %v1101 = vsel %vm408, %v1099, %v1100
          %v1103 = vadd.f32 %v1083, %v1101
          %s1104 = sld [smem:[#allocation6 + $0x1a]]
          %v1105 = vstv %s1104
          %v1106 = vmul.f32 %v1105, %v444
          %1108 = vrot.lane.b32.xlu0 %v1106, 80
          %v1109 = vpop.permute.xlu0 %1108
          %v1110 = vrot.slane %v1109, 7
          %v1111 = vsel %vm429, %v1110, %v1109
          %v1113 = vadd.f32 %v1093, %v1111
          %s1114 = sld [smem:[#allocation6 + $0x4b]]
          %v1115 = vstv %s1114
          %v1116 = vmul.f32 %v1115, %v456
          %1118 = vrot.lane.b32.xlu0 %v1116, 80
          %v1119 = vpop.permute.xlu0 %1118
          %v1120 = vrot.slane %v1119, 7
          %v1121 = vsel %vm429, %v1120, %v1119
          %v1123 = vadd.f32 %v1103, %v1121
          %s1124 = sld [smem:[#allocation6 + $0x21]]
          %v1125 = vstv %s1124
          %v1126 = vmul.f32 %v1125, %v444
          %1128 = vrot.lane.b32.xlu0 %v1126, 64
          %v1129 = vpop.permute.xlu0 %1128
          %v1130 = vrot.slane %v1129, 7
          %v1131 = vsel %vm451, %v1130, %v1129
          %v1133 = vadd.f32 %v1113, %v1131
          %s1134 = sld [smem:[#allocation6 + $0x52]]
          %v1135 = vstv %s1134
          %v1136 = vmul.f32 %v1135, %v456
          %1138 = vrot.lane.b32.xlu0 %v1136, 64
          %v1139 = vpop.permute.xlu0 %1138
          %v1140 = vrot.slane %v1139, 7
          %v1141 = vsel %vm451, %v1140, %v1139
          %v1143 = vadd.f32 %v1123, %v1141
          %s1144 = sld [smem:[#allocation6 + $0x28]]
          %v1145 = vstv %s1144
          %v1146 = vmul.f32 %v1145, %v444
          %1148 = vrot.lane.b32.xlu0 %v1146, 48
          %v1149 = vpop.permute.xlu0 %1148
          %v1150 = vrot.slane %v1149, 7
          %v1151 = vsel %vm473, %v1150, %v1149
          %v1153 = vadd.f32 %v1133, %v1151
          %s1154 = sld [smem:[#allocation6 + $0x59]]
          %v1155 = vstv %s1154
          %v1156 = vmul.f32 %v1155, %v456
          %1158 = vrot.lane.b32.xlu0 %v1156, 48
          %v1159 = vpop.permute.xlu0 %1158
          %v1160 = vrot.slane %v1159, 7
          %v1161 = vsel %vm473, %v1160, %v1159
          %v1163 = vadd.f32 %v1143, %v1161
          %s1164 = sld [smem:[#allocation6 + $0x2f]]
          %v1165 = vstv %s1164
          %v1166 = vmul.f32 %v1165, %v444
          %1168 = vrot.lane.b32.xlu0 %v1166, 32
          %v1169 = vpop.permute.xlu0 %1168
          %v1170 = vrot.slane %v1169, 7
          %v1171 = vsel %vm494, %v1170, %v1169
          %v1173 = vadd.f32 %v1153, %v1171
          %s1174 = sld [smem:[#allocation6 + $0x60]]
          %v1175 = vstv %s1174
          %v1176 = vmul.f32 %v1175, %v456
          %1178 = vrot.lane.b32.xlu0 %v1176, 32
          %v1179 = vpop.permute.xlu0 %1178
          %v1180 = vrot.slane %v1179, 7
          %v1181 = vsel %vm494, %v1180, %v1179
          %v1183 = vadd.f32 %v1163, %v1181
          %v1184 = vadd.f32 %v1173, %v1183
          %s1185 = scalar_lea.vmem [#allocation10], 5
          %v1186 = vld [vmem:[%s1185] ss:$8 sm:$0x3]
          %1188 = vrot.lane.b32.xlu0 %v1186, 82
          %v1189 = vpop.permute.xlu0 %1188
          %v1190 = vrot.slane %v1189, 7
          %vm1191 = vcmask 670720
          %v1192 = vsel %vm1191, %v1190, %v1189
          %v1194 = vmul.f32 %v1184, %v1192
          %s1195 = sld [smem:[#allocation6 + $0x6]]
          %v1196 = vstv %s1195
          %v1197 = vmul.f32 %v1196, %v373
          %s1198 = sld [smem:[#allocation6 + $0x37]]
          %v1199 = vstv %s1198
          %v1200 = vmul.f32 %v1199, %v377
          %s1201 = sld [smem:[#allocation6 + $0xd]]
          %v1202 = vstv %s1201
          %v1203 = vmul.f32 %v1202, %v373
          %1205 = vrot.lane.b32.xlu0 %v1203, 112
          %v1206 = vpop.permute.xlu0 %1205
          %v1207 = vrot.slane %v1206, 1
          %v1208 = vsel %vm387, %v1206, %v1207
          %v1210 = vadd.f32 %v1197, %v1208
          %s1211 = sld [smem:[#allocation6 + $0x3e]]
          %v1212 = vstv %s1211
          %v1213 = vmul.f32 %v1212, %v377
          %1215 = vrot.lane.b32.xlu0 %v1213, 112
          %v1216 = vpop.permute.xlu0 %1215
          %v1217 = vrot.slane %v1216, 1
          %v1218 = vsel %vm387, %v1216, %v1217
          %v1220 = vadd.f32 %v1200, %v1218
          %s1221 = sld [smem:[#allocation6 + $0x14]]
          %v1222 = vstv %s1221
          %v1223 = vmul.f32 %v1222, %v373
          %1225 = vrot.lane.b32.xlu0 %v1223, 96
          %v1226 = vpop.permute.xlu0 %1225
          %v1227 = vrot.slane %v1226, 1
          %v1228 = vsel %vm408, %v1226, %v1227
          %v1230 = vadd.f32 %v1210, %v1228
          %s1231 = sld [smem:[#allocation6 + $0x45]]
          %v1232 = vstv %s1231
          %v1233 = vmul.f32 %v1232, %v377
          %1235 = vrot.lane.b32.xlu0 %v1233, 96
          %v1236 = vpop.permute.xlu0 %1235
          %v1237 = vrot.slane %v1236, 1
          %v1238 = vsel %vm408, %v1236, %v1237
          %v1240 = vadd.f32 %v1220, %v1238
          %s1241 = sld [smem:[#allocation6 + $0x1b]]
          %v1242 = vstv %s1241
          %v1243 = vmul.f32 %v1242, %v444
          %1245 = vrot.lane.b32.xlu0 %v1243, 80
          %v1246 = vpop.permute.xlu0 %1245
          %v1247 = vrot.slane %v1246, 7
          %v1248 = vsel %vm429, %v1247, %v1246
          %v1250 = vadd.f32 %v1230, %v1248
          %s1251 = sld [smem:[#allocation6 + $0x4c]]
          %v1252 = vstv %s1251
          %v1253 = vmul.f32 %v1252, %v456
          %1255 = vrot.lane.b32.xlu0 %v1253, 80
          %v1256 = vpop.permute.xlu0 %1255
          %v1257 = vrot.slane %v1256, 7
          %v1258 = vsel %vm429, %v1257, %v1256
          %v1260 = vadd.f32 %v1240, %v1258
          %s1261 = sld [smem:[#allocation6 + $0x22]]
          %v1262 = vstv %s1261
          %v1263 = vmul.f32 %v1262, %v444
          %1265 = vrot.lane.b32.xlu0 %v1263, 64
          %v1266 = vpop.permute.xlu0 %1265
          %v1267 = vrot.slane %v1266, 7
          %v1268 = vsel %vm451, %v1267, %v1266
          %v1270 = vadd.f32 %v1250, %v1268
          %s1271 = sld [smem:[#allocation6 + $0x53]]
          %v1272 = vstv %s1271
          %v1273 = vmul.f32 %v1272, %v456
          %1275 = vrot.lane.b32.xlu0 %v1273, 64
          %v1276 = vpop.permute.xlu0 %1275
          %v1277 = vrot.slane %v1276, 7
          %v1278 = vsel %vm451, %v1277, %v1276
          %v1280 = vadd.f32 %v1260, %v1278
          %s1281 = sld [smem:[#allocation6 + $0x29]]
          %v1282 = vstv %s1281
          %v1283 = vmul.f32 %v1282, %v444
          %1285 = vrot.lane.b32.xlu0 %v1283, 48
          %v1286 = vpop.permute.xlu0 %1285
          %v1287 = vrot.slane %v1286, 7
          %v1288 = vsel %vm473, %v1287, %v1286
          %v1290 = vadd.f32 %v1270, %v1288
          %s1291 = sld [smem:[#allocation6 + $0x5a]]
          %v1292 = vstv %s1291
          %v1293 = vmul.f32 %v1292, %v456
          %1295 = vrot.lane.b32.xlu0 %v1293, 48
          %v1296 = vpop.permute.xlu0 %1295
          %v1297 = vrot.slane %v1296, 7
          %v1298 = vsel %vm473, %v1297, %v1296
          %v1300 = vadd.f32 %v1280, %v1298
          %s1301 = sld [smem:[#allocation6 + $0x30]]
          %v1302 = vstv %s1301
          %v1303 = vmul.f32 %v1302, %v444
          %1305 = vrot.lane.b32.xlu0 %v1303, 32
          %v1306 = vpop.permute.xlu0 %1305
          %v1307 = vrot.slane %v1306, 7
          %v1308 = vsel %vm494, %v1307, %v1306
          %v1310 = vadd.f32 %v1290, %v1308
          %s1311 = sld [smem:[#allocation6 + $0x61]]
          %v1312 = vstv %s1311
          %v1313 = vmul.f32 %v1312, %v456
          %1315 = vrot.lane.b32.xlu0 %v1313, 32
          %v1316 = vpop.permute.xlu0 %1315
          %v1317 = vrot.slane %v1316, 7
          %v1318 = vsel %vm494, %v1317, %v1316
          %v1320 = vadd.f32 %v1300, %v1318
          %v1321 = vadd.f32 %v1310, %v1320
          %s1322 = scalar_lea.vmem [#allocation10], 6
          %v1323 = vld [vmem:[%s1322] ss:$8 sm:$0x3]
          %1325 = vrot.lane.b32.xlu0 %v1323, 83
          %v1326 = vpop.permute.xlu0 %1325
          %v1327 = vrot.slane %v1326, 7
          %vm1328 = vcmask 678912
          %v1329 = vsel %vm1328, %v1327, %v1326
          %v1331 = vmul.f32 %v1321, %v1329
          %1333 = vrot.lane.b32.xlu0 %v654, 127
          %v1334 = vpop.permute.xlu0 %1333
          %v1335 = vrot.slane %v1334, 1
          %vm1336 = vcmask 1039360
          %v1337 = vsel %vm1336, %v1334, %v1335
          %v1339 = vadd.f32 %v517, %v1337
          %1341 = vrot.lane.b32.xlu0 %v920, 127
          %v1342 = vpop.permute.xlu0 %1341
          %v1343 = vrot.slane %v1342, 1
          %v1344 = vsel %vm1336, %v1342, %v1343
          %v1346 = vadd.f32 %v791, %v1344
          %1348 = vrot.lane.b32.xlu0 %v1194, 127
          %v1349 = vpop.permute.xlu0 %1348
          %v1350 = vrot.slane %v1349, 1
          %v1351 = vsel %vm1336, %v1349, %v1350
          %v1353 = vadd.f32 %v1057, %v1351
          %1355 = vrot.lane.b32.xlu0 %v1346, 126
          %v1356 = vpop.permute.xlu0 %1355
          %v1357 = vrot.slane %v1356, 1
          %vm1358 = vcmask 1031168
          %v1359 = vsel %vm1358, %v1356, %v1357
          %v1361 = vadd.f32 %v1339, %v1359
          %1363 = vrot.lane.b32.xlu0 %v1331, 126
          %v1364 = vpop.permute.xlu0 %1363
          %v1365 = vrot.slane %v1364, 1
          %v1366 = vsel %vm1358, %v1364, %v1365
          %v1368 = vadd.f32 %v1353, %v1366
          %1370 = vrot.lane.b32.xlu0 %v1368, 124
          %v1371 = vpop.permute.xlu0 %1370
          %v1372 = vrot.slane %v1371, 1
          %vm1373 = vcmask 1014784
          %v1374 = vsel %vm1373, %v1371, %v1372
          %v1376 = vadd.f32 %v1361, %v1374
          %v1377 = vxor.u32 %v1376, 2147483648
          %v1378 = vmul.f32 %v1377, 1.442695
          %v1379 = vpow.pop %v1378
          %v1380 = vadd.f32 %v1379, 1.0
          %v1381 = vrcp.pop %v1380
          %v1382 = vmul.f32 1.0, %v1381
          %1384 = vrot.lane.b32.xlu0 %v1382, 51
          %v1385 = vpop.permute.xlu0 %1384
          %v1386 = vrot.slane %v1385, 1
          %vm1387 = vcmask 416768
          %v1388 = vsel %vm1387, %v1385, %v1386
          %1390 = vst.msk [vmem:[%s227] sm:$0x3] %vm368, %v1388
        $region56: #{tpu_custom_call.1} parent=31 // pred_fallthru
          _
        %s1391 = sand.u32 %s112, 1
        %s1392 = scalar_lea.sflag [#allocation8], %s1391
        %s1393 = sand.u32 %s112, 1
        %s1394 = smul.addr %s1393, 2
        %s1395 = scalar_lea.vmem [#allocation13], %s1394
        // Predicated region
        $region57: #{tpu_custom_call.1} parent=31 // pred_check
          %p1396 = pneg %p122
        $region58: #{tpu_custom_call.1} parent=31 // pred_check_branch
          %1398 = sbr.rel (%p1396) target = $region60
        $region59: #{tpu_custom_call.1} parent=31 // pred_region
          %s1400 = ssub.s32 32, 32
          %1401 = vsyncadd %s1392, %s1400
          %s1402 = smul.addr %s26, 2
          %s1403 = smul.addr %s1402, 16
          %s1404 = scalar_lea.hbm %s3, %s1403
          %s1406 = sshll.u32 %s1395, 4
          %s1407 = int_to_ptr.vmem [resolvable:$true] %s1406
          %1409 = dma.vmem_to_hbm [thread:$0]  %s1407, 32, %s1404, %s1392
        $region60: #{tpu_custom_call.1} parent=31 // pred_fallthru
          _
      $region32: #{tpu_custom_call.1} parent=5 // pred_fallthru
        _
      %p1410 = scmp.le.s32.totalorder 2, %s17
      // Predicated region
      $region61: #{tpu_custom_call.1} parent=5 // pred_check
        %p1411 = pneg %p1410
      $region62: #{tpu_custom_call.1} parent=5 // pred_check_branch
        %1413 = sbr.rel (%p1411) target = $region64
      $region63: #{tpu_custom_call.1} parent=5 // pred_region
        %s1414 = ssub.s32 %s17, 2
        // Predicated region
        $region65: #{tpu_custom_call.1} parent=63 // pred_check
          %p1415 = pneg %p128
        $region66: #{tpu_custom_call.1} parent=63 // pred_check_branch
          %1417 = sbr.rel (%p1415) target = $region68
        $region67: #{tpu_custom_call.1} parent=63 // pred_region
          %s1418 = sand.u32 %s113, 1
          %s1419 = scalar_lea.sflag [#allocation8], %s1418
          %s1420 = sand.u32 %s113, 1
          %s1421 = smul.addr %s1420, 2
          %s1422 = scalar_lea.vmem [#allocation13], %s1421
          %1423 = dma.done %s1419, 32
        $region68: #{tpu_custom_call.1} parent=63 // pred_fallthru
          _
      $region64: #{tpu_custom_call.1} parent=5 // pred_fallthru
        _
    $region6: #{tpu_custom_call.1} parent=1 // loop_footer
      %s21 = sadd.s32 1, %s17
    $region7: #{tpu_custom_call.1} parent=1 // loop_footer_branch
      %16 = sbr.rel target = $region3
    $region8: #{tpu_custom_call.1} parent=1 // loop_exit
      _
    %1424 = vsyncpa [#allocation7], 1
    %s1425 = scalar_lea.sflag [#allocation7], 1
    %1426 = vsyncpa %s1425, 1
    %1427 = vsyncpa [#allocation12], 1
    %s1428 = scalar_lea.sflag [#allocation12], 1
    %1429 = vsyncpa %s1428, 1
    %1430 = vsyncpa [#allocation8], 1
    %s1431 = scalar_lea.sflag [#allocation8], 1
    %1432 = vsyncpa %s1431, 1
    %1433 = vsyncpa [#allocation9], 1
    %s1434 = scalar_lea.sflag [#allocation9], 1
    %1435 = vsyncpa %s1434, 1

</llo_original>
